<compile_context>
chip_gen: v7x
topology: tpu7x:2x2x1
jax: 0.10.0
libtpu: 0.0.40
codegen_flags: <defaults>
</compile_context>

<pallas_src>
import math
import jax
import jax.numpy as jnp
from jax.experimental import pallas as pl
from jax.experimental.pallas import tpu as pltpu


def _make_attention_kernel(batch: int, tgt_len: int, src_len: int,
                           num_heads: int, head_dim: int):
    scale = 1.0 / math.sqrt(head_dim)

    def kernel(q_in_ref, k_in_ref, v_in_ref,
               wq_ref, bq_ref, wk_ref, bk_ref, wv_ref, bv_ref,
               wo_ref, bo_ref,
               out_ref, attn_ref):
        # ---- fused Q/K/V projections on the (B*T, E) / (B*S, E) slabs --------------
        xq = q_in_ref[...]                      # (B*T, E)
        xk = k_in_ref[...]                      # (B*S, E)
        xv = v_in_ref[...]                      # (B*S, E)

        # One big MXU matmul per projection (all batches & heads fused).
        # The 1/sqrt(head_dim) scale is folded into q once, right here.
        q = (jnp.dot(xq, wq_ref[...], preferred_element_type=jnp.float32)
             + bq_ref[...]) * scale             # (B*T, E)
        k = jnp.dot(xk, wk_ref[...], preferred_element_type=jnp.float32) + bk_ref[...]
        v = jnp.dot(xv, wv_ref[...], preferred_element_type=jnp.float32) + bv_ref[...]

        # ---- regroup (batch, head)-major once: (B*H, rows, head_dim) ---------------
        # (pure data movement; the projection matmuls above already ran fully fused)
        def to_groups(x, rows):
            return jnp.stack(
                [x[b * rows:(b + 1) * rows, h * head_dim:(h + 1) * head_dim]
                 for b in range(batch) for h in range(num_heads)],
                axis=0)
        qg = to_groups(q, tgt_len)              # (B*H, T, hd)
        kg = to_groups(k, src_len)              # (B*H, S, hd)
        vg = to_groups(v, src_len)              # (B*H, S, hd)

        # ---- scores / softmax / context: one batched contraction per stage ---------
        s = jnp.einsum('gtd,gsd->gts', qg, kg,
                       preferred_element_type=jnp.float32)    # (B*H, T, S)

        # Numerically-stable softmax; divide replaced by EUP approx reciprocal.
        m = jnp.max(s, axis=-1, keepdims=True)
        p = jnp.exp(s - m)
        denom = jnp.sum(p, axis=-1, keepdims=True)
        w = p * pl.reciprocal(denom, approx=True)             # (B*H, T, S)

        ctx = jnp.einsum('gts,gsd->gtd', w, vg,
                         preferred_element_type=jnp.float32)  # (B*H, T, hd)

        # ---- merge heads back to (B*T, E) and run ONE output-projection matmul -----
        ctx_cat = jnp.concatenate(
            [jnp.concatenate([ctx[b * num_heads + h] for h in range(num_heads)],
                             axis=1)                          # (T, E) per batch
             for b in range(batch)],
            axis=0)                                           # (B*T, E)
        out = (jnp.dot(ctx_cat, wo_ref[...], preferred_element_type=jnp.float32)
               + bo_ref[...])

        # ---- single whole-slab stores (no per-head partial writes) -----------------
        out_ref[...] = out                                    # (B*T, E)
        attn_ref[...] = w                                     # (B*H, T, S) flat slab

    return kernel


def quaternion_attention(query, key, value, params, num_heads):
    """query/key/value: (B, T, E) float32.  Returns (output (B,T,E), attn (B,H,T,S))."""
    B, T, E = query.shape
    S = key.shape[1]
    hd = E // num_heads

    # Pre-transpose weights to (in, out) so the kernel computes y = x @ W + b.
    wq = params["wq"].T
    wk = params["wk"].T
    wv = params["wv"].T
    wo = params["wo"].T
    bq = params["bq"].reshape(1, E)
    bk = params["bk"].reshape(1, E)
    bv = params["bv"].reshape(1, E)
    bo = params["bo"].reshape(1, E)

    # Batch/seq fused into flat slabs (free, row-major): one grid step, one big
    # matmul per projection.
    q2 = query.reshape(B * T, E)
    k2 = key.reshape(B * S, E)
    v2 = value.reshape(B * S, E)

    kernel = _make_attention_kernel(B, T, S, num_heads, hd)

    def full(shape):
        return pl.BlockSpec(shape, lambda i: (0,) * len(shape))

    out2, attn = pl.pallas_call(
        kernel,
        out_shape=(
            jax.ShapeDtypeStruct((B * T, E), jnp.float32),
            jax.ShapeDtypeStruct((B * num_heads, T, S), jnp.float32),
        ),
        grid_spec=pltpu.PrefetchScalarGridSpec(
            num_scalar_prefetch=0,
            grid=(1,),
            in_specs=[
                full((B * T, E)),            # query slab
                full((B * S, E)),            # key slab
                full((B * S, E)),            # value slab
                full((E, E)), full((1, E)),  # wq, bq
                full((E, E)), full((1, E)),  # wk, bk
                full((E, E)), full((1, E)),  # wv, bv
                full((E, E)),                # wo
                full((1, E)),                # bo
            ],
            out_specs=[
                full((B * T, E)),
                full((B * num_heads, T, S)),
            ],
        ),
        compiler_params=pltpu.CompilerParams(
            dimension_semantics=("arbitrary",)),
    )(q2, k2, v2, wq, bq, wk, bk, wv, bv, wo, bo)

    # Leading-dim reshapes outside the kernel are free (pure metadata in XLA).
    return out2.reshape(B, T, E), attn.reshape(B, num_heads, T, S)


def init_params(key, embed_dim):
    """Deterministic synthetic parameters (PyTorch Linear: weight (out,in), bias (out,))."""
    ks = jax.random.split(key, 8)
    s = 1.0 / math.sqrt(embed_dim)
    p = {}
    names = ["q", "k", "v", "o"]
    for i, n in enumerate(names):
        p[f"w{n}"] = jax.random.uniform(ks[2 * i], (embed_dim, embed_dim),
                                        jnp.float32, -s, s)
        p[f"b{n}"] = jax.random.uniform(ks[2 * i + 1], (embed_dim,),
                                        jnp.float32, -s, s)
    return p


def reference(query, key, value, params, num_heads):
    """Plain-JAX reference matching the PyTorch forward."""
    B, T, E = query.shape
    S = key.shape[1]
    hd = E // num_heads
    q = query @ params["wq"].T + params["bq"]
    k = key @ params["wk"].T + params["bk"]
    v = value @ params["wv"].T + params["bv"]
    q = q.reshape(B, T, num_heads, hd).transpose(0, 2, 1, 3)
    k = k.reshape(B, S, num_heads, hd).transpose(0, 2, 1, 3)
    v = v.reshape(B, S, num_heads, hd).transpose(0, 2, 1, 3)
    scores = jnp.einsum("bhtd,bhsd->bhts", q, k) / math.sqrt(hd)
    attn = jax.nn.softmax(scores, axis=-1)
    out = jnp.einsum("bhts,bhsd->bhtd", attn, v)
    out = out.transpose(0, 2, 1, 3).reshape(B, T, E)
    out = out @ params["wo"].T + params["bo"]
    return out, attn


if __name__ == "__main__":
    B, SEQ, EMBED, HEADS = 2, 8, 32, 4

    root = jax.random.PRNGKey(0)
    kq, kk, kv, kp = jax.random.split(root, 4)
    query = jax.random.normal(kq, (B, SEQ, EMBED), jnp.float32)
    key = jax.random.normal(kk, (B, SEQ, EMBED), jnp.float32)
    value = jax.random.normal(kv, (B, SEQ, EMBED), jnp.float32)
    params = init_params(kp, EMBED)

    out, attn = quaternion_attention(query, key, value, params, HEADS)
    out = jax.block_until_ready(out)
    attn = jax.block_until_ready(attn)

    ref_out, ref_attn = reference(query, key, value, params, HEADS)
    # Tolerance relaxed slightly vs. exact-division softmax because the kernel uses
    # the EUP approximate reciprocal for the softmax denominator.
    assert jnp.allclose(out, ref_out, atol=2e-3, rtol=2e-3), "output mismatch"
    assert jnp.allclose(attn, ref_attn, atol=2e-3, rtol=2e-3), "attn mismatch"

    print("KERNEL_OK")
</pallas_src>

<mosaic_0001>
module attributes {stable_mosaic.version = 11 : i64} {
  func.func @kernel(%arg0: i32, %arg1: memref<16x32xf32, #tpu.memory_space<vmem>>, %arg2: memref<16x32xf32, #tpu.memory_space<vmem>>, %arg3: memref<16x32xf32, #tpu.memory_space<vmem>>, %arg4: memref<32x32xf32, #tpu.memory_space<vmem>>, %arg5: memref<1x32xf32, #tpu.memory_space<vmem>>, %arg6: memref<32x32xf32, #tpu.memory_space<vmem>>, %arg7: memref<1x32xf32, #tpu.memory_space<vmem>>, %arg8: memref<32x32xf32, #tpu.memory_space<vmem>>, %arg9: memref<1x32xf32, #tpu.memory_space<vmem>>, %arg10: memref<32x32xf32, #tpu.memory_space<vmem>>, %arg11: memref<1x32xf32, #tpu.memory_space<vmem>>, %arg12: memref<16x32xf32, #tpu.memory_space<vmem>>, %arg13: memref<8x8x8xf32, #tpu.memory_space<vmem>>) attributes {dimension_semantics = [#tpu.dimension_semantics<arbitrary>], iteration_bounds = array<i64: 1>, scalar_prefetch = 0 : i64, scratch_operands = 0 : i64, tpu.core_type = #tpu.core_type<tc>, window_params = [{pipeline_mode = #tpu.pipeline_mode<synchronous>, transform_indices = @transform_0, window_bounds = array<i64: 16, 32>}, {pipeline_mode = #tpu.pipeline_mode<synchronous>, transform_indices = @transform_1, window_bounds = array<i64: 16, 32>}, {pipeline_mode = #tpu.pipeline_mode<synchronous>, transform_indices = @transform_2, window_bounds = array<i64: 16, 32>}, {pipeline_mode = #tpu.pipeline_mode<synchronous>, transform_indices = @transform_3, window_bounds = array<i64: 32, 32>}, {pipeline_mode = #tpu.pipeline_mode<synchronous>, transform_indices = @transform_4, window_bounds = array<i64: 1, 32>}, {pipeline_mode = #tpu.pipeline_mode<synchronous>, transform_indices = @transform_5, window_bounds = array<i64: 32, 32>}, {pipeline_mode = #tpu.pipeline_mode<synchronous>, transform_indices = @transform_6, window_bounds = array<i64: 1, 32>}, {pipeline_mode = #tpu.pipeline_mode<synchronous>, transform_indices = @transform_7, window_bounds = array<i64: 32, 32>}, {pipeline_mode = #tpu.pipeline_mode<synchronous>, transform_indices = @transform_8, window_bounds = array<i64: 1, 32>}, {pipeline_mode = #tpu.pipeline_mode<synchronous>, transform_indices = @transform_9, window_bounds = array<i64: 32, 32>}, {pipeline_mode = #tpu.pipeline_mode<synchronous>, transform_indices = @transform_10, window_bounds = array<i64: 1, 32>}, {pipeline_mode = #tpu.pipeline_mode<synchronous>, transform_indices = @transform_11, window_bounds = array<i64: 16, 32>}, {pipeline_mode = #tpu.pipeline_mode<synchronous>, transform_indices = @transform_12, window_bounds = array<i64: 8, 8, 8>}]} {
    %c0 = arith.constant 0 : index
    %c0_0 = arith.constant 0 : index
    %0 = vector.load %arg1[%c0, %c0_0] : memref<16x32xf32, #tpu.memory_space<vmem>>, vector<16x32xf32>
    %c0_1 = arith.constant 0 : index
    %c0_2 = arith.constant 0 : index
    %1 = vector.load %arg2[%c0_1, %c0_2] : memref<16x32xf32, #tpu.memory_space<vmem>>, vector<16x32xf32>
    %c0_3 = arith.constant 0 : index
    %c0_4 = arith.constant 0 : index
    %2 = vector.load %arg3[%c0_3, %c0_4] : memref<16x32xf32, #tpu.memory_space<vmem>>, vector<16x32xf32>
    %c0_5 = arith.constant 0 : index
    %c0_6 = arith.constant 0 : index
    %3 = vector.load %arg4[%c0_5, %c0_6] : memref<32x32xf32, #tpu.memory_space<vmem>>, vector<32x32xf32>
    %cst = arith.constant dense<0.000000e+00> : vector<16x32xf32>
    %4 = tpu.matmul %0, %3, %cst {dimension_numbers = #tpu.dot_dimension_numbers<[1], [0], [0], [1], [0, 0, 1, 1], [], []>} : vector<16x32xf32>, vector<32x32xf32>, vector<16x32xf32> -> vector<16x32xf32>
    %c0_7 = arith.constant 0 : index
    %c0_8 = arith.constant 0 : index
    %5 = vector.load %arg5[%c0_7, %c0_8] : memref<1x32xf32, #tpu.memory_space<vmem>>, vector<1x32xf32>
    %6 = vector.broadcast %5 : vector<1x32xf32> to vector<16x32xf32>
    %7 = arith.addf %4, %6 : vector<16x32xf32>
    %cst_9 = arith.constant 0.353553385 : f32
    %8 = vector.broadcast %cst_9 : f32 to vector<16x32xf32>
    %9 = arith.mulf %7, %8 : vector<16x32xf32>
    %c0_10 = arith.constant 0 : index
    %c0_11 = arith.constant 0 : index
    %10 = vector.load %arg6[%c0_10, %c0_11] : memref<32x32xf32, #tpu.memory_space<vmem>>, vector<32x32xf32>
    %cst_12 = arith.constant dense<0.000000e+00> : vector<16x32xf32>
    %11 = tpu.matmul %1, %10, %cst_12 {dimension_numbers = #tpu.dot_dimension_numbers<[1], [0], [0], [1], [0, 0, 1, 1], [], []>} : vector<16x32xf32>, vector<32x32xf32>, vector<16x32xf32> -> vector<16x32xf32>
    %c0_13 = arith.constant 0 : index
    %c0_14 = arith.constant 0 : index
    %12 = vector.load %arg7[%c0_13, %c0_14] : memref<1x32xf32, #tpu.memory_space<vmem>>, vector<1x32xf32>
    %13 = vector.broadcast %12 : vector<1x32xf32> to vector<16x32xf32>
    %14 = arith.addf %11, %13 : vector<16x32xf32>
    %c0_15 = arith.constant 0 : index
    %c0_16 = arith.constant 0 : index
    %15 = vector.load %arg8[%c0_15, %c0_16] : memref<32x32xf32, #tpu.memory_space<vmem>>, vector<32x32xf32>
    %cst_17 = arith.constant dense<0.000000e+00> : vector<16x32xf32>
    %16 = tpu.matmul %2, %15, %cst_17 {dimension_numbers = #tpu.dot_dimension_numbers<[1], [0], [0], [1], [0, 0, 1, 1], [], []>} : vector<16x32xf32>, vector<32x32xf32>, vector<16x32xf32> -> vector<16x32xf32>
    %c0_18 = arith.constant 0 : index
    %c0_19 = arith.constant 0 : index
    %17 = vector.load %arg9[%c0_18, %c0_19] : memref<1x32xf32, #tpu.memory_space<vmem>>, vector<1x32xf32>
    %18 = vector.broadcast %17 : vector<1x32xf32> to vector<16x32xf32>
    %19 = arith.addf %16, %18 : vector<16x32xf32>
    %20 = vector.extract_strided_slice %9 {offsets = [0, 0], sizes = [8, 8], strides = [1, 1]} : vector<16x32xf32> to vector<8x8xf32>
    %21 = vector.extract_strided_slice %9 {offsets = [0, 8], sizes = [8, 8], strides = [1, 1]} : vector<16x32xf32> to vector<8x8xf32>
    %22 = vector.extract_strided_slice %9 {offsets = [0, 16], sizes = [8, 8], strides = [1, 1]} : vector<16x32xf32> to vector<8x8xf32>
    %23 = vector.extract_strided_slice %9 {offsets = [0, 24], sizes = [8, 8], strides = [1, 1]} : vector<16x32xf32> to vector<8x8xf32>
    %24 = vector.extract_strided_slice %9 {offsets = [8, 0], sizes = [8, 8], strides = [1, 1]} : vector<16x32xf32> to vector<8x8xf32>
    %25 = vector.extract_strided_slice %9 {offsets = [8, 8], sizes = [8, 8], strides = [1, 1]} : vector<16x32xf32> to vector<8x8xf32>
    %26 = vector.extract_strided_slice %9 {offsets = [8, 16], sizes = [8, 8], strides = [1, 1]} : vector<16x32xf32> to vector<8x8xf32>
    %27 = vector.extract_strided_slice %9 {offsets = [8, 24], sizes = [8, 8], strides = [1, 1]} : vector<16x32xf32> to vector<8x8xf32>
    %28 = vector.shape_cast %20 : vector<8x8xf32> to vector<1x8x8xf32>
    %29 = vector.shape_cast %21 : vector<8x8xf32> to vector<1x8x8xf32>
    %30 = vector.shape_cast %22 : vector<8x8xf32> to vector<1x8x8xf32>
    %31 = vector.shape_cast %23 : vector<8x8xf32> to vector<1x8x8xf32>
    %32 = vector.shape_cast %24 : vector<8x8xf32> to vector<1x8x8xf32>
    %33 = vector.shape_cast %25 : vector<8x8xf32> to vector<1x8x8xf32>
    %34 = vector.shape_cast %26 : vector<8x8xf32> to vector<1x8x8xf32>
    %35 = vector.shape_cast %27 : vector<8x8xf32> to vector<1x8x8xf32>
    %36 = tpu.concatenate %28, %29, %30, %31, %32, %33, %34, %35 in 0 : vector<1x8x8xf32>, vector<1x8x8xf32>, vector<1x8x8xf32>, vector<1x8x8xf32>, vector<1x8x8xf32>, vector<1x8x8xf32>, vector<1x8x8xf32>, vector<1x8x8xf32> -> vector<8x8x8xf32>
    %37 = vector.extract_strided_slice %14 {offsets = [0, 0], sizes = [8, 8], strides = [1, 1]} : vector<16x32xf32> to vector<8x8xf32>
    %38 = vector.extract_strided_slice %14 {offsets = [0, 8], sizes = [8, 8], strides = [1, 1]} : vector<16x32xf32> to vector<8x8xf32>
    %39 = vector.extract_strided_slice %14 {offsets = [0, 16], sizes = [8, 8], strides = [1, 1]} : vector<16x32xf32> to vector<8x8xf32>
    %40 = vector.extract_strided_slice %14 {offsets = [0, 24], sizes = [8, 8], strides = [1, 1]} : vector<16x32xf32> to vector<8x8xf32>
    %41 = vector.extract_strided_slice %14 {offsets = [8, 0], sizes = [8, 8], strides = [1, 1]} : vector<16x32xf32> to vector<8x8xf32>
    %42 = vector.extract_strided_slice %14 {offsets = [8, 8], sizes = [8, 8], strides = [1, 1]} : vector<16x32xf32> to vector<8x8xf32>
    %43 = vector.extract_strided_slice %14 {offsets = [8, 16], sizes = [8, 8], strides = [1, 1]} : vector<16x32xf32> to vector<8x8xf32>
    %44 = vector.extract_strided_slice %14 {offsets = [8, 24], sizes = [8, 8], strides = [1, 1]} : vector<16x32xf32> to vector<8x8xf32>
    %45 = vector.shape_cast %37 : vector<8x8xf32> to vector<1x8x8xf32>
    %46 = vector.shape_cast %38 : vector<8x8xf32> to vector<1x8x8xf32>
    %47 = vector.shape_cast %39 : vector<8x8xf32> to vector<1x8x8xf32>
    %48 = vector.shape_cast %40 : vector<8x8xf32> to vector<1x8x8xf32>
    %49 = vector.shape_cast %41 : vector<8x8xf32> to vector<1x8x8xf32>
    %50 = vector.shape_cast %42 : vector<8x8xf32> to vector<1x8x8xf32>
    %51 = vector.shape_cast %43 : vector<8x8xf32> to vector<1x8x8xf32>
    %52 = vector.shape_cast %44 : vector<8x8xf32> to vector<1x8x8xf32>
    %53 = tpu.concatenate %45, %46, %47, %48, %49, %50, %51, %52 in 0 : vector<1x8x8xf32>, vector<1x8x8xf32>, vector<1x8x8xf32>, vector<1x8x8xf32>, vector<1x8x8xf32>, vector<1x8x8xf32>, vector<1x8x8xf32>, vector<1x8x8xf32> -> vector<8x8x8xf32>
    %54 = vector.extract_strided_slice %19 {offsets = [0, 0], sizes = [8, 8], strides = [1, 1]} : vector<16x32xf32> to vector<8x8xf32>
    %55 = vector.extract_strided_slice %19 {offsets = [0, 8], sizes = [8, 8], strides = [1, 1]} : vector<16x32xf32> to vector<8x8xf32>
    %56 = vector.extract_strided_slice %19 {offsets = [0, 16], sizes = [8, 8], strides = [1, 1]} : vector<16x32xf32> to vector<8x8xf32>
    %57 = vector.extract_strided_slice %19 {offsets = [0, 24], sizes = [8, 8], strides = [1, 1]} : vector<16x32xf32> to vector<8x8xf32>
    %58 = vector.extract_strided_slice %19 {offsets = [8, 0], sizes = [8, 8], strides = [1, 1]} : vector<16x32xf32> to vector<8x8xf32>
    %59 = vector.extract_strided_slice %19 {offsets = [8, 8], sizes = [8, 8], strides = [1, 1]} : vector<16x32xf32> to vector<8x8xf32>
    %60 = vector.extract_strided_slice %19 {offsets = [8, 16], sizes = [8, 8], strides = [1, 1]} : vector<16x32xf32> to vector<8x8xf32>
    %61 = vector.extract_strided_slice %19 {offsets = [8, 24], sizes = [8, 8], strides = [1, 1]} : vector<16x32xf32> to vector<8x8xf32>
    %62 = vector.shape_cast %54 : vector<8x8xf32> to vector<1x8x8xf32>
    %63 = vector.shape_cast %55 : vector<8x8xf32> to vector<1x8x8xf32>
    %64 = vector.shape_cast %56 : vector<8x8xf32> to vector<1x8x8xf32>
    %65 = vector.shape_cast %57 : vector<8x8xf32> to vector<1x8x8xf32>
    %66 = vector.shape_cast %58 : vector<8x8xf32> to vector<1x8x8xf32>
    %67 = vector.shape_cast %59 : vector<8x8xf32> to vector<1x8x8xf32>
    %68 = vector.shape_cast %60 : vector<8x8xf32> to vector<1x8x8xf32>
    %69 = vector.shape_cast %61 : vector<8x8xf32> to vector<1x8x8xf32>
    %70 = tpu.concatenate %62, %63, %64, %65, %66, %67, %68, %69 in 0 : vector<1x8x8xf32>, vector<1x8x8xf32>, vector<1x8x8xf32>, vector<1x8x8xf32>, vector<1x8x8xf32>, vector<1x8x8xf32>, vector<1x8x8xf32>, vector<1x8x8xf32> -> vector<8x8x8xf32>
    "tpu.trace_start"() <{level = 10 : i32, message = "gtd,gsd->gts"}> : () -> ()
    %cst_20 = arith.constant dense<0.000000e+00> : vector<8x8x8xf32>
    %71 = tpu.matmul %36, %53, %cst_20 {dimension_numbers = #tpu.dot_dimension_numbers<[2], [2], [1], [1], [0, 0, 0, 1, 1, 1], [0], [0]>} : vector<8x8x8xf32>, vector<8x8x8xf32>, vector<8x8x8xf32> -> vector<8x8x8xf32>
    "tpu.trace_stop"() : () -> ()
    %cst_21 = arith.constant dense<0xFF800000> : vector<8x8xf32>
    %72 = vector.multi_reduction <maximumf>, %71, %cst_21 [2] : vector<8x8x8xf32> to vector<8x8xf32>
    %73 = vector.shape_cast %72 : vector<8x8xf32> to vector<8x8x1xf32>
    %74 = vector.broadcast %73 : vector<8x8x1xf32> to vector<8x8x8xf32>
    %75 = arith.subf %71, %74 : vector<8x8x8xf32>
    %76 = math.exp %75 : vector<8x8x8xf32>
    %cst_22 = arith.constant dense<0.000000e+00> : vector<8x8xf32>
    %77 = vector.multi_reduction <add>, %76, %cst_22 [2] : vector<8x8x8xf32> to vector<8x8xf32>
    %78 = vector.shape_cast %77 : vector<8x8xf32> to vector<8x8x1xf32>
    %79 = tpu.reciprocal %78 {approx = true} : vector<8x8x1xf32> -> vector<8x8x1xf32>
    %80 = vector.broadcast %79 : vector<8x8x1xf32> to vector<8x8x8xf32>
    %81 = arith.mulf %76, %80 : vector<8x8x8xf32>
    "tpu.trace_start"() <{level = 10 : i32, message = "gts,gsd->gtd"}> : () -> ()
    %cst_23 = arith.constant dense<0.000000e+00> : vector<8x8x8xf32>
    %82 = tpu.matmul %81, %70, %cst_23 {dimension_numbers = #tpu.dot_dimension_numbers<[2], [1], [1], [2], [0, 0, 0, 1, 1, 2], [0], [0]>} : vector<8x8x8xf32>, vector<8x8x8xf32>, vector<8x8x8xf32> -> vector<8x8x8xf32>
    "tpu.trace_stop"() : () -> ()
    %83 = vector.extract_strided_slice %82 {offsets = [0, 0, 0], sizes = [1, 8, 8], strides = [1, 1, 1]} : vector<8x8x8xf32> to vector<1x8x8xf32>
    %84 = vector.shape_cast %83 : vector<1x8x8xf32> to vector<8x8xf32>
    %85 = vector.extract_strided_slice %82 {offsets = [1, 0, 0], sizes = [1, 8, 8], strides = [1, 1, 1]} : vector<8x8x8xf32> to vector<1x8x8xf32>
    %86 = vector.shape_cast %85 : vector<1x8x8xf32> to vector<8x8xf32>
    %87 = vector.extract_strided_slice %82 {offsets = [2, 0, 0], sizes = [1, 8, 8], strides = [1, 1, 1]} : vector<8x8x8xf32> to vector<1x8x8xf32>
    %88 = vector.shape_cast %87 : vector<1x8x8xf32> to vector<8x8xf32>
    %89 = vector.extract_strided_slice %82 {offsets = [3, 0, 0], sizes = [1, 8, 8], strides = [1, 1, 1]} : vector<8x8x8xf32> to vector<1x8x8xf32>
    %90 = vector.shape_cast %89 : vector<1x8x8xf32> to vector<8x8xf32>
    %91 = tpu.concatenate %84, %86, %88, %90 in 1 : vector<8x8xf32>, vector<8x8xf32>, vector<8x8xf32>, vector<8x8xf32> -> vector<8x32xf32>
    %92 = vector.extract_strided_slice %82 {offsets = [4, 0, 0], sizes = [1, 8, 8], strides = [1, 1, 1]} : vector<8x8x8xf32> to vector<1x8x8xf32>
    %93 = vector.shape_cast %92 : vector<1x8x8xf32> to vector<8x8xf32>
    %94 = vector.extract_strided_slice %82 {offsets = [5, 0, 0], sizes = [1, 8, 8], strides = [1, 1, 1]} : vector<8x8x8xf32> to vector<1x8x8xf32>
    %95 = vector.shape_cast %94 : vector<1x8x8xf32> to vector<8x8xf32>
    %96 = vector.extract_strided_slice %82 {offsets = [6, 0, 0], sizes = [1, 8, 8], strides = [1, 1, 1]} : vector<8x8x8xf32> to vector<1x8x8xf32>
    %97 = vector.shape_cast %96 : vector<1x8x8xf32> to vector<8x8xf32>
    %98 = vector.extract_strided_slice %82 {offsets = [7, 0, 0], sizes = [1, 8, 8], strides = [1, 1, 1]} : vector<8x8x8xf32> to vector<1x8x8xf32>
    %99 = vector.shape_cast %98 : vector<1x8x8xf32> to vector<8x8xf32>
    %100 = tpu.concatenate %93, %95, %97, %99 in 1 : vector<8x8xf32>, vector<8x8xf32>, vector<8x8xf32>, vector<8x8xf32> -> vector<8x32xf32>
    %101 = tpu.concatenate %91, %100 in 0 : vector<8x32xf32>, vector<8x32xf32> -> vector<16x32xf32>
    %c0_24 = arith.constant 0 : index
    %c0_25 = arith.constant 0 : index
    %102 = vector.load %arg10[%c0_24, %c0_25] : memref<32x32xf32, #tpu.memory_space<vmem>>, vector<32x32xf32>
    %cst_26 = arith.constant dense<0.000000e+00> : vector<16x32xf32>
    %103 = tpu.matmul %101, %102, %cst_26 {dimension_numbers = #tpu.dot_dimension_numbers<[1], [0], [0], [1], [0, 0, 1, 1], [], []>} : vector<16x32xf32>, vector<32x32xf32>, vector<16x32xf32> -> vector<16x32xf32>
    %c0_27 = arith.constant 0 : index
    %c0_28 = arith.constant 0 : index
    %104 = vector.load %arg11[%c0_27, %c0_28] : memref<1x32xf32, #tpu.memory_space<vmem>>, vector<1x32xf32>
    %105 = vector.broadcast %104 : vector<1x32xf32> to vector<16x32xf32>
    %106 = arith.addf %103, %105 : vector<16x32xf32>
    %c0_29 = arith.constant 0 : index
    %c0_30 = arith.constant 0 : index
    %107 = vector.load %arg12[%c0_29, %c0_30] : memref<16x32xf32, #tpu.memory_space<vmem>>, vector<16x32xf32>
    tpu.vector_store %arg12[%c0_29, %c0_30], %106 {strides = array<i32>} : memref<16x32xf32, #tpu.memory_space<vmem>>, vector<16x32xf32>,
    %c0_31 = arith.constant 0 : index
    %c0_32 = arith.constant 0 : index
    %c0_33 = arith.constant 0 : index
    %108 = vector.load %arg13[%c0_31, %c0_32, %c0_33] : memref<8x8x8xf32, #tpu.memory_space<vmem>>, vector<8x8x8xf32>
    tpu.vector_store %arg13[%c0_31, %c0_32, %c0_33], %81 {strides = array<i32>} : memref<8x8x8xf32, #tpu.memory_space<vmem>>, vector<8x8x8xf32>,
    return
  }
  func.func @transform_0(%arg0: i32) -> (i32, i32) {
    %c0_i32 = arith.constant 0 : i32
    %c0_i32_0 = arith.constant 0 : i32
    %c0_i32_1 = arith.constant 0 : i32
    return %c0_i32, %c0_i32_0 : i32, i32
  }
  func.func @transform_1(%arg0: i32) -> (i32, i32) {
    %c0_i32 = arith.constant 0 : i32
    %c0_i32_0 = arith.constant 0 : i32
    %c0_i32_1 = arith.constant 0 : i32
    return %c0_i32, %c0_i32_0 : i32, i32
  }
  func.func @transform_2(%arg0: i32) -> (i32, i32) {
    %c0_i32 = arith.constant 0 : i32
    %c0_i32_0 = arith.constant 0 : i32
    %c0_i32_1 = arith.constant 0 : i32
    return %c0_i32, %c0_i32_0 : i32, i32
  }
  func.func @transform_3(%arg0: i32) -> (i32, i32) {
    %c0_i32 = arith.constant 0 : i32
    %c0_i32_0 = arith.constant 0 : i32
    %c0_i32_1 = arith.constant 0 : i32
    return %c0_i32, %c0_i32_0 : i32, i32
  }
  func.func @transform_4(%arg0: i32) -> (i32, i32) {
    %c0_i32 = arith.constant 0 : i32
    %c0_i32_0 = arith.constant 0 : i32
    %c0_i32_1 = arith.constant 0 : i32
    return %c0_i32, %c0_i32_0 : i32, i32
  }
  func.func @transform_5(%arg0: i32) -> (i32, i32) {
    %c0_i32 = arith.constant 0 : i32
    %c0_i32_0 = arith.constant 0 : i32
    %c0_i32_1 = arith.constant 0 : i32
    return %c0_i32, %c0_i32_0 : i32, i32
  }
  func.func @transform_6(%arg0: i32) -> (i32, i32) {
    %c0_i32 = arith.constant 0 : i32
    %c0_i32_0 = arith.constant 0 : i32
    %c0_i32_1 = arith.constant 0 : i32
    return %c0_i32, %c0_i32_0 : i32, i32
  }
  func.func @transform_7(%arg0: i32) -> (i32, i32) {
    %c0_i32 = arith.constant 0 : i32
    %c0_i32_0 = arith.constant 0 : i32
    %c0_i32_1 = arith.constant 0 : i32
    return %c0_i32, %c0_i32_0 : i32, i32
  }
  func.func @transform_8(%arg0: i32) -> (i32, i32) {
    %c0_i32 = arith.constant 0 : i32
    %c0_i32_0 = arith.constant 0 : i32
    %c0_i32_1 = arith.constant 0 : i32
    return %c0_i32, %c0_i32_0 : i32, i32
  }
  func.func @transform_9(%arg0: i32) -> (i32, i32) {
    %c0_i32 = arith.constant 0 : i32
    %c0_i32_0 = arith.constant 0 : i32
    %c0_i32_1 = arith.constant 0 : i32
    return %c0_i32, %c0_i32_0 : i32, i32
  }
  func.func @transform_10(%arg0: i32) -> (i32, i32) {
    %c0_i32 = arith.constant 0 : i32
    %c0_i32_0 = arith.constant 0 : i32
    %c0_i32_1 = arith.constant 0 : i32
    return %c0_i32, %c0_i32_0 : i32, i32
  }
  func.func @transform_11(%arg0: i32) -> (i32, i32) {
    %c0_i32 = arith.constant 0 : i32
    %c0_i32_0 = arith.constant 0 : i32
    %c0_i32_1 = arith.constant 0 : i32
    return %c0_i32, %c0_i32_0 : i32, i32
  }
  func.func @transform_12(%arg0: i32) -> (i32, i32, i32) {
    %c0_i32 = arith.constant 0 : i32
    %c0_i32_0 = arith.constant 0 : i32
    %c0_i32_1 = arith.constant 0 : i32
    %c0_i32_2 = arith.constant 0 : i32
    return %c0_i32, %c0_i32_0, %c0_i32_1 : i32, i32, i32
  }
}

</mosaic_0001>

<llo_original>
// kernel: tpu_custom_call.1
$region0: #{tpu_custom_call.1}
  #allocation0 [shape = 'u32[]', space=smem, size = 0x4, offset = 0x4, fixed_abs, tag = 'smem constant byte address 0x4 - core index']
  #allocation1 [shape = 'u32[144,128]{1,0:T(1,128)}', space=vmem, size = 0x12000, scoped, tag = 'internal scratch']
  %s0 = inlined_call_operand.hbm [shape: f32[16,32], index: 0, kind: input, shape index: {}]
  %s1 = inlined_call_operand.hbm [shape: f32[16,32], index: 1, kind: input, shape index: {}]
  %s2 = inlined_call_operand.hbm [shape: f32[16,32], index: 2, kind: input, shape index: {}]
  %s3 = inlined_call_operand.hbm [shape: f32[32,32], index: 3, kind: input, shape index: {}]
  %s4 = inlined_call_operand.vmem [shape: f32[1,32], index: 4, kind: input, shape index: {}]
  %s5 = inlined_call_operand.hbm [shape: f32[32,32], index: 5, kind: input, shape index: {}]
  %s6 = inlined_call_operand.vmem [shape: f32[1,32], index: 6, kind: input, shape index: {}]
  %s7 = inlined_call_operand.hbm [shape: f32[32,32], index: 7, kind: input, shape index: {}]
  %s8 = inlined_call_operand.hbm [shape: f32[1,32], index: 8, kind: input, shape index: {}]
  %s9 = inlined_call_operand.vmem [shape: f32[32,32], index: 9, kind: input, shape index: {}]
  %s10 = inlined_call_operand.vmem [shape: f32[1,32], index: 10, kind: input, shape index: {}]
  %s11 = inlined_call_operand.hbm [shape: f32[16,32], index: 11, kind: output, shape index: {0}]
  %s12 = inlined_call_operand.hbm [shape: f32[8,8,8], index: 12, kind: output, shape index: {1}]
  %13 = xla_tuple %s11, %s12
  %s14 = sld [smem:[#allocation0]]
  $region90: #{tpu_custom_call.1} parent=0
    _
  %s16 = ssub.s32 1, %s14
  %s17 = scalar_select 0, %s16, %s14
  $region1: #{tpu_custom_call.1} parent=0
    #allocation2 [shape = 'u8[8192]{0}', space=vmem, size = 0x2000, scoped, tag = 'input window, operand 0, single buffered']
    #allocation3 [shape = 's32[1]{0}', space=sflag, size = 0x4, scoped, tag = 'scoped memory for tpu_custom_call.1']
    #allocation4 [shape = 's32[1]{0}', space=sflag, size = 0x4, scoped, tag = 'scoped memory for tpu_custom_call.1']
    #allocation5 [shape = 'u8[8192]{0}', space=vmem, size = 0x2000, scoped, tag = 'input window, operand 1, single buffered']
    #allocation6 [shape = 's32[1]{0}', space=sflag, size = 0x4, scoped, tag = 'scoped memory for tpu_custom_call.1']
    #allocation7 [shape = 'u8[8192]{0}', space=vmem, size = 0x2000, scoped, tag = 'input window, operand 2, single buffered']
    #allocation8 [shape = 'u8[16384]{0}', space=vmem, size = 0x4000, scoped, tag = 'input window, operand 3, single buffered']
    #allocation9 [shape = 's32[1]{0}', space=sflag, size = 0x4, scoped, tag = 'scoped memory for tpu_custom_call.1']
    #allocation10 [shape = 'u8[16384]{0}', space=vmem, size = 0x4000, scoped, tag = 'input window, operand 5, single buffered']
    #allocation11 [shape = 'u8[16384]{0}', space=vmem, size = 0x4000, scoped, tag = 'input window, operand 7, single buffered']
    #allocation12 [shape = 's32[1]{0}', space=sflag, size = 0x4, scoped, tag = 'scoped memory for tpu_custom_call.1']
    #allocation13 [shape = 'u8[512]{0}', space=vmem, size = 0x400, scoped, tag = 'input window, operand 8, single buffered']
    #allocation14 [shape = 'u8[8192]{0}', space=vmem, size = 0x2000, scoped, tag = 'output window, operand 0, single buffered']
    #allocation15 [shape = 'u8[32768]{0}', space=vmem, size = 0x8000, scoped, tag = 'output window, operand 1, single buffered']
    #allocation16 [shape = 's32[1]{0}', space=sflag, size = 0x4, scoped, tag = 'scoped memory for tpu_custom_call.1']
    %18 = vsyncpa [#allocation3], 0
    %19 = vsyncpa [#allocation6], 0
    %20 = vsyncpa [#allocation9], 0
    %21 = vsyncpa [#allocation12], 0
    %22 = vsyncpa [#allocation4], 0
    %23 = vsyncpa [#allocation16], 0
    // Predicated region
    $region2: #{tpu_custom_call.1} parent=1 // pred_check
      _
    $region3: #{tpu_custom_call.1} parent=1 // pred_check_branch
      %25 = sbr.rel (0) target = $region5
    $region4: #{tpu_custom_call.1} parent=1 // pred_region
      %s27 = ssub.s32 256, 256
      %28 = vsyncadd [#allocation3], %s27
      %s29 = sshll.u32 [#allocation2], 4
      %s30 = int_to_ptr.vmem [resolvable:$true] %s29
      %35 = dma.hbm_to_vmem [thread:$0]  %s0, 256, %s30, [#allocation3], 128, 128, 8
    $region5: #{tpu_custom_call.1} parent=1 // pred_fallthru
      _
    // Predicated region
    $region6: #{tpu_custom_call.1} parent=1 // pred_check
      _
    $region7: #{tpu_custom_call.1} parent=1 // pred_check_branch
      %37 = sbr.rel (0) target = $region9
    $region8: #{tpu_custom_call.1} parent=1 // pred_region
      %s39 = ssub.s32 256, 256
      %40 = vsyncadd [#allocation6], %s39
      %s41 = sshll.u32 [#allocation5], 4
      %s42 = int_to_ptr.vmem [resolvable:$true] %s41
      %47 = dma.hbm_to_vmem [thread:$0]  %s1, 256, %s42, [#allocation6], 128, 128, 8
    $region9: #{tpu_custom_call.1} parent=1 // pred_fallthru
      _
    // Predicated region
    $region10: #{tpu_custom_call.1} parent=1 // pred_check
      _
    $region11: #{tpu_custom_call.1} parent=1 // pred_check_branch
      %49 = sbr.rel (0) target = $region13
    $region12: #{tpu_custom_call.1} parent=1 // pred_region
      %s51 = ssub.s32 256, 256
      %52 = vsyncadd [#allocation6], %s51
      %s53 = sshll.u32 [#allocation7], 4
      %s54 = int_to_ptr.vmem [resolvable:$true] %s53
      %59 = dma.hbm_to_vmem [thread:$0]  %s2, 256, %s54, [#allocation6], 128, 128, 8
    $region13: #{tpu_custom_call.1} parent=1 // pred_fallthru
      _
    // Predicated region
    $region14: #{tpu_custom_call.1} parent=1 // pred_check
      _
    $region15: #{tpu_custom_call.1} parent=1 // pred_check_branch
      %61 = sbr.rel (0) target = $region17
    $region16: #{tpu_custom_call.1} parent=1 // pred_region
      %s63 = ssub.s32 512, 512
      %64 = vsyncadd [#allocation9], %s63
      %s65 = sshll.u32 [#allocation8], 4
      %s66 = int_to_ptr.vmem [resolvable:$true] %s65
      %71 = dma.hbm_to_vmem [thread:$0]  %s3, 512, %s66, [#allocation9], 128, 128, 8
    $region17: #{tpu_custom_call.1} parent=1 // pred_fallthru
      _
    // Predicated region
    $region18: #{tpu_custom_call.1} parent=1 // pred_check
      _
    $region19: #{tpu_custom_call.1} parent=1 // pred_check_branch
      %73 = sbr.rel (0) target = $region21
    $region20: #{tpu_custom_call.1} parent=1 // pred_region
      _
    $region21: #{tpu_custom_call.1} parent=1 // pred_fallthru
      _
    // Predicated region
    $region22: #{tpu_custom_call.1} parent=1 // pred_check
      _
    $region23: #{tpu_custom_call.1} parent=1 // pred_check_branch
      %75 = sbr.rel (0) target = $region25
    $region24: #{tpu_custom_call.1} parent=1 // pred_region
      %s77 = ssub.s32 512, 512
      %78 = vsyncadd [#allocation9], %s77
      %s79 = sshll.u32 [#allocation10], 4
      %s80 = int_to_ptr.vmem [resolvable:$true] %s79
      %85 = dma.hbm_to_vmem [thread:$0]  %s5, 512, %s80, [#allocation9], 128, 128, 8
    $region25: #{tpu_custom_call.1} parent=1 // pred_fallthru
      _
    // Predicated region
    $region26: #{tpu_custom_call.1} parent=1 // pred_check
      _
    $region27: #{tpu_custom_call.1} parent=1 // pred_check_branch
      %87 = sbr.rel (0) target = $region29
    $region28: #{tpu_custom_call.1} parent=1 // pred_region
      _
    $region29: #{tpu_custom_call.1} parent=1 // pred_fallthru
      _
    // Predicated region
    $region30: #{tpu_custom_call.1} parent=1 // pred_check
      _
    $region31: #{tpu_custom_call.1} parent=1 // pred_check_branch
      %89 = sbr.rel (0) target = $region33
    $region32: #{tpu_custom_call.1} parent=1 // pred_region
      %s91 = ssub.s32 512, 512
      %92 = vsyncadd [#allocation12], %s91
      %s93 = sshll.u32 [#allocation11], 4
      %s94 = int_to_ptr.vmem [resolvable:$true] %s93
      %99 = dma.hbm_to_vmem [thread:$0]  %s7, 512, %s94, [#allocation12], 128, 128, 8
    $region33: #{tpu_custom_call.1} parent=1 // pred_fallthru
      _
    // Predicated region
    $region34: #{tpu_custom_call.1} parent=1 // pred_check
      _
    $region35: #{tpu_custom_call.1} parent=1 // pred_check_branch
      %101 = sbr.rel (0) target = $region37
    $region36: #{tpu_custom_call.1} parent=1 // pred_region
      %s103 = ssub.s32 16, 16
      %104 = vsyncadd [#allocation12], %s103
      %s106 = sshll.u32 [#allocation13], 4
      %s107 = int_to_ptr.vmem [resolvable:$true] %s106
      %109 = dma.hbm_to_vmem [thread:$0]  %s8, 16, %s107, [#allocation12]
    $region37: #{tpu_custom_call.1} parent=1 // pred_fallthru
      _
    // Predicated region
    $region38: #{tpu_custom_call.1} parent=1 // pred_check
      _
    $region39: #{tpu_custom_call.1} parent=1 // pred_check_branch
      %111 = sbr.rel (0) target = $region41
    $region40: #{tpu_custom_call.1} parent=1 // pred_region
      _
    $region41: #{tpu_custom_call.1} parent=1 // pred_fallthru
      _
    // Predicated region
    $region42: #{tpu_custom_call.1} parent=1 // pred_check
      _
    $region43: #{tpu_custom_call.1} parent=1 // pred_check_branch
      %113 = sbr.rel (0) target = $region45
    $region44: #{tpu_custom_call.1} parent=1 // pred_region
      _
    $region45: #{tpu_custom_call.1} parent=1 // pred_fallthru
      _
    // Predicated region
    $region46: #{tpu_custom_call.1} parent=1 // pred_check
      _
    $region47: #{tpu_custom_call.1} parent=1 // pred_check_branch
      %115 = sbr.rel (0) target = $region49
    $region48: #{tpu_custom_call.1} parent=1 // pred_region
      %116 = dma.done [#allocation3], 256
    $region49: #{tpu_custom_call.1} parent=1 // pred_fallthru
      _
    // Predicated region
    $region50: #{tpu_custom_call.1} parent=1 // pred_check
      _
    $region51: #{tpu_custom_call.1} parent=1 // pred_check_branch
      %118 = sbr.rel (0) target = $region53
    $region52: #{tpu_custom_call.1} parent=1 // pred_region
      %119 = dma.done [#allocation6], 256
    $region53: #{tpu_custom_call.1} parent=1 // pred_fallthru
      _
    // Predicated region
    $region54: #{tpu_custom_call.1} parent=1 // pred_check
      _
    $region55: #{tpu_custom_call.1} parent=1 // pred_check_branch
      %121 = sbr.rel (0) target = $region57
    $region56: #{tpu_custom_call.1} parent=1 // pred_region
      %122 = dma.done [#allocation6], 256
    $region57: #{tpu_custom_call.1} parent=1 // pred_fallthru
      _
    // Predicated region
    $region58: #{tpu_custom_call.1} parent=1 // pred_check
      _
    $region59: #{tpu_custom_call.1} parent=1 // pred_check_branch
      %124 = sbr.rel (0) target = $region61
    $region60: #{tpu_custom_call.1} parent=1 // pred_region
      %125 = dma.done [#allocation9], 512
    $region61: #{tpu_custom_call.1} parent=1 // pred_fallthru
      _
    // Predicated region
    $region62: #{tpu_custom_call.1} parent=1 // pred_check
      _
    $region63: #{tpu_custom_call.1} parent=1 // pred_check_branch
      %127 = sbr.rel (0) target = $region65
    $region64: #{tpu_custom_call.1} parent=1 // pred_region
      %128 = dma.done [#allocation9], 512
    $region65: #{tpu_custom_call.1} parent=1 // pred_fallthru
      _
    // Predicated region
    $region66: #{tpu_custom_call.1} parent=1 // pred_check
      _
    $region67: #{tpu_custom_call.1} parent=1 // pred_check_branch
      %130 = sbr.rel (0) target = $region69
    $region68: #{tpu_custom_call.1} parent=1 // pred_region
      %131 = dma.done [#allocation12], 512
    $region69: #{tpu_custom_call.1} parent=1 // pred_fallthru
      _
    // Predicated region
    $region70: #{tpu_custom_call.1} parent=1 // pred_check
      _
    $region71: #{tpu_custom_call.1} parent=1 // pred_check_branch
      %133 = sbr.rel (0) target = $region73
    $region72: #{tpu_custom_call.1} parent=1 // pred_region
      %134 = dma.done [#allocation12], 16
    $region73: #{tpu_custom_call.1} parent=1 // pred_fallthru
      _
    %v135 = vld [vmem:[#allocation2] sm:$0xff]
    %v136 = vld [vmem:[#allocation2 + $0x8] sm:$0xff]
    %v137 = vld [vmem:[#allocation5] sm:$0xff]
    %v138 = vld [vmem:[#allocation5 + $0x8] sm:$0xff]
    %v139 = vld [vmem:[#allocation7] sm:$0xff]
    %v140 = vld [vmem:[#allocation7 + $0x8] sm:$0xff]
    %v141 = vld [vmem:[#allocation8] sm:$0xff]
    %v142 = vld [vmem:[#allocation8 + $0x8] sm:$0xff]
    %v143 = vld [vmem:[#allocation8 + $0x10] sm:$0xff]
    %v144 = vld [vmem:[#allocation8 + $0x18] sm:$0xff]
    %v145 = vld [vmem:[%s4] sm:$0x1]
    %v147 = vlaneseq
    %v148 = vshrl.u32 %v147, 7
    %v149 = vsub.s32 0, %v148
    %v150 = vrot.slane %v145, %v149
    %vm152 = vcmask 261120
    %v154 = vsel %vm152, %v135, 0
    %v157 = vsel %vm152, %v136, 0
    %159 = vmatprep.subr.mxu0 0.0
    %160 = vmatpush1.msra.mxu0 %v141
    %161 = vmatprep.subr.mxu0 0.0
    %162 = vmatpush1.msra.mxu0 %v142
    %163 = vmatprep.subr.mxu0 0.0
    %164 = vmatpush1.msra.mxu0 %v143
    %165 = vmatprep.subr.mxu0 0.0
    %166 = vmatpush1.msra.mxu0 %v144
    %167 = vmatprep.subr.mxu0 0.0
    %168 = vmatpush1.msra.mxu0 0.0
    %169 = vmatprep.subr.mxu0 0.0
    %170 = vmatpush1.msra.mxu0 0.0
    %171 = vmatprep.subr.mxu0 0.0
    %172 = vmatpush1.msra.mxu0 0.0
    %173 = vmatprep.subr.mxu0 0.0
    %174 = vmatpush1.msra.mxu0 0.0
    %175 = vmatprep.subr.mxu0 0.0
    %176 = vmatpush1.msra.mxu0 0.0
    %177 = vmatprep.subr.mxu0 0.0
    %178 = vmatpush1.msra.mxu0 0.0
    %179 = vmatprep.subr.mxu0 0.0
    %180 = vmatpush1.msra.mxu0 0.0
    %181 = vmatprep.subr.mxu0 0.0
    %182 = vmatpush1.msra.mxu0 0.0
    %183 = vmatprep.subr.mxu0 0.0
    %184 = vmatpush1.msra.mxu0 0.0
    %185 = vmatprep.subr.mxu0 0.0
    %186 = vmatpush1.msra.mxu0 0.0
    %187 = vmatprep.subr.mxu0 0.0
    %188 = vmatpush1.msra.mxu0 0.0
    %189 = vmatprep.subr.mxu0 0.0
    %190 = vmatpush1.msra.mxu0 0.0
    %191 = vmatprep.subr.mxu0 0.0
    %192 = vmatpush1.msra.mxu0 0.0
    %193 = vmatprep.subr.mxu0 0.0
    %194 = vmatpush1.msra.mxu0 0.0
    %195 = vmatprep.subr.mxu0 0.0
    %196 = vmatpush1.msra.mxu0 0.0
    %197 = vmatprep.subr.mxu0 0.0
    %198 = vmatpush1.msra.mxu0 0.0
    %199 = vmatprep.subr.mxu0 0.0
    %200 = vmatpush1.msra.mxu0 0.0
    %201 = vmatprep.subr.mxu0 0.0
    %202 = vmatpush1.msra.mxu0 0.0
    %203 = vmatprep.subr.mxu0 0.0
    %204 = vmatpush1.msra.mxu0 0.0
    %205 = vmatprep.subr.mxu0 0.0
    %206 = vmatpush1.msra.mxu0 0.0
    %207 = vmatprep.subr.mxu0 0.0
    %208 = vmatpush1.msra.mxu0 0.0
    %209 = vmatprep.subr.mxu0 0.0
    %210 = vmatpush1.msra.mxu0 0.0
    %211 = vmatprep.subr.mxu0 0.0
    %212 = vmatpush1.msra.mxu0 0.0
    %213 = vmatprep.subr.mxu0 0.0
    %214 = vmatpush1.msra.mxu0 0.0
    %215 = vmatprep.subr.mxu0 0.0
    %216 = vmatpush1.msra.mxu0 0.0
    %217 = vmatprep.subr.mxu0 0.0
    %218 = vmatpush1.msra.mxu0 0.0
    %219 = vmatprep.subr.mxu0 0.0
    %220 = vmatpush1.msra.mxu0 0.0
    %221 = vmatprep.subr.mxu0 0.0
    %222 = vmatpush1.msra.mxu0 0.0
    %223 = vmatprep.mubr.f32.mxu0 0.0
    %224 = vmatmul.mubr.f32.gmra.mrb[0].mxu0 %v154
    %v225 = vpop.f32.mrb[0].mxu0
    %v226 = vadd.f32 %v150, %v225
    %v227 = vpop.f32.mrb[0].mxu0
    %228 = vmatprep.mubr.f32.mxu0 0.0
    %229 = vmatmul.mubr.f32.gmra.mrb[0].mxu0 %v157
    %v230 = vpop.f32.mrb[0].mxu0
    %v231 = vadd.f32 %v150, %v230
    %v232 = vpop.f32.mrb[0].mxu0
    %233 = vdwg.mxu0
    %v234 = vmul.f32 %v226, 0.35355338
    %v235 = vmul.f32 %v231, 0.35355338
    %v236 = vld [vmem:[#allocation10] sm:$0xff]
    %v237 = vld [vmem:[#allocation10 + $0x8] sm:$0xff]
    %v238 = vld [vmem:[#allocation10 + $0x10] sm:$0xff]
    %v239 = vld [vmem:[#allocation10 + $0x18] sm:$0xff]
    %v240 = vld [vmem:[%s6] sm:$0x1]
    %v242 = vlaneseq
    %v243 = vshrl.u32 %v242, 7
    %v244 = vsub.s32 0, %v243
    %v245 = vrot.slane %v240, %v244
    %v248 = vsel %vm152, %v137, 0
    %v251 = vsel %vm152, %v138, 0
    %253 = vmatprep.subr.mxu0 0.0
    %254 = vmatpush1.msra.mxu0 %v236
    %255 = vmatprep.subr.mxu0 0.0
    %256 = vmatpush1.msra.mxu0 %v237
    %257 = vmatprep.subr.mxu0 0.0
    %258 = vmatpush1.msra.mxu0 %v238
    %259 = vmatprep.subr.mxu0 0.0
    %260 = vmatpush1.msra.mxu0 %v239
    %261 = vmatprep.subr.mxu0 0.0
    %262 = vmatpush1.msra.mxu0 0.0
    %263 = vmatprep.subr.mxu0 0.0
    %264 = vmatpush1.msra.mxu0 0.0
    %265 = vmatprep.subr.mxu0 0.0
    %266 = vmatpush1.msra.mxu0 0.0
    %267 = vmatprep.subr.mxu0 0.0
    %268 = vmatpush1.msra.mxu0 0.0
    %269 = vmatprep.subr.mxu0 0.0
    %270 = vmatpush1.msra.mxu0 0.0
    %271 = vmatprep.subr.mxu0 0.0
    %272 = vmatpush1.msra.mxu0 0.0
    %273 = vmatprep.subr.mxu0 0.0
    %274 = vmatpush1.msra.mxu0 0.0
    %275 = vmatprep.subr.mxu0 0.0
    %276 = vmatpush1.msra.mxu0 0.0
    %277 = vmatprep.subr.mxu0 0.0
    %278 = vmatpush1.msra.mxu0 0.0
    %279 = vmatprep.subr.mxu0 0.0
    %280 = vmatpush1.msra.mxu0 0.0
    %281 = vmatprep.subr.mxu0 0.0
    %282 = vmatpush1.msra.mxu0 0.0
    %283 = vmatprep.subr.mxu0 0.0
    %284 = vmatpush1.msra.mxu0 0.0
    %285 = vmatprep.subr.mxu0 0.0
    %286 = vmatpush1.msra.mxu0 0.0
    %287 = vmatprep.subr.mxu0 0.0
    %288 = vmatpush1.msra.mxu0 0.0
    %289 = vmatprep.subr.mxu0 0.0
    %290 = vmatpush1.msra.mxu0 0.0
    %291 = vmatprep.subr.mxu0 0.0
    %292 = vmatpush1.msra.mxu0 0.0
    %293 = vmatprep.subr.mxu0 0.0
    %294 = vmatpush1.msra.mxu0 0.0
    %295 = vmatprep.subr.mxu0 0.0
    %296 = vmatpush1.msra.mxu0 0.0
    %297 = vmatprep.subr.mxu0 0.0
    %298 = vmatpush1.msra.mxu0 0.0
    %299 = vmatprep.subr.mxu0 0.0
    %300 = vmatpush1.msra.mxu0 0.0
    %301 = vmatprep.subr.mxu0 0.0
    %302 = vmatpush1.msra.mxu0 0.0
    %303 = vmatprep.subr.mxu0 0.0
    %304 = vmatpush1.msra.mxu0 0.0
    %305 = vmatprep.subr.mxu0 0.0
    %306 = vmatpush1.msra.mxu0 0.0
    %307 = vmatprep.subr.mxu0 0.0
    %308 = vmatpush1.msra.mxu0 0.0
    %309 = vmatprep.subr.mxu0 0.0
    %310 = vmatpush1.msra.mxu0 0.0
    %311 = vmatprep.subr.mxu0 0.0
    %312 = vmatpush1.msra.mxu0 0.0
    %313 = vmatprep.subr.mxu0 0.0
    %314 = vmatpush1.msra.mxu0 0.0
    %315 = vmatprep.subr.mxu0 0.0
    %316 = vmatpush1.msra.mxu0 0.0
    %317 = vmatprep.mubr.f32.mxu0 0.0
    %318 = vmatmul.mubr.f32.gmra.mrb[0].mxu0 %v248
    %v319 = vpop.f32.mrb[0].mxu0
    %v320 = vadd.f32 %v245, %v319
    %v321 = vpop.f32.mrb[0].mxu0
    %322 = vmatprep.mubr.f32.mxu0 0.0
    %323 = vmatmul.mubr.f32.gmra.mrb[0].mxu0 %v251
    %v324 = vpop.f32.mrb[0].mxu0
    %v325 = vadd.f32 %v245, %v324
    %v326 = vpop.f32.mrb[0].mxu0
    %327 = vdwg.mxu0
    %v328 = vld [vmem:[#allocation11] sm:$0xff]
    %v329 = vld [vmem:[#allocation11 + $0x8] sm:$0xff]
    %v330 = vld [vmem:[#allocation11 + $0x10] sm:$0xff]
    %v331 = vld [vmem:[#allocation11 + $0x18] sm:$0xff]
    %v332 = vld [vmem:[#allocation13] sm:$0x1]
    %v334 = vlaneseq
    %v335 = vshrl.u32 %v334, 7
    %v336 = vsub.s32 0, %v335
    %v337 = vrot.slane %v332, %v336
    %v340 = vsel %vm152, %v139, 0
    %v343 = vsel %vm152, %v140, 0
    %345 = vmatprep.subr.mxu0 0.0
    %346 = vmatpush1.msra.mxu0 %v328
    %347 = vmatprep.subr.mxu0 0.0
    %348 = vmatpush1.msra.mxu0 %v329
    %349 = vmatprep.subr.mxu0 0.0
    %350 = vmatpush1.msra.mxu0 %v330
    %351 = vmatprep.subr.mxu0 0.0
    %352 = vmatpush1.msra.mxu0 %v331
    %353 = vmatprep.subr.mxu0 0.0
    %354 = vmatpush1.msra.mxu0 0.0
    %355 = vmatprep.subr.mxu0 0.0
    %356 = vmatpush1.msra.mxu0 0.0
    %357 = vmatprep.subr.mxu0 0.0
    %358 = vmatpush1.msra.mxu0 0.0
    %359 = vmatprep.subr.mxu0 0.0
    %360 = vmatpush1.msra.mxu0 0.0
    %361 = vmatprep.subr.mxu0 0.0
    %362 = vmatpush1.msra.mxu0 0.0
    %363 = vmatprep.subr.mxu0 0.0
    %364 = vmatpush1.msra.mxu0 0.0
    %365 = vmatprep.subr.mxu0 0.0
    %366 = vmatpush1.msra.mxu0 0.0
    %367 = vmatprep.subr.mxu0 0.0
    %368 = vmatpush1.msra.mxu0 0.0
    %369 = vmatprep.subr.mxu0 0.0
    %370 = vmatpush1.msra.mxu0 0.0
    %371 = vmatprep.subr.mxu0 0.0
    %372 = vmatpush1.msra.mxu0 0.0
    %373 = vmatprep.subr.mxu0 0.0
    %374 = vmatpush1.msra.mxu0 0.0
    %375 = vmatprep.subr.mxu0 0.0
    %376 = vmatpush1.msra.mxu0 0.0
    %377 = vmatprep.subr.mxu0 0.0
    %378 = vmatpush1.msra.mxu0 0.0
    %379 = vmatprep.subr.mxu0 0.0
    %380 = vmatpush1.msra.mxu0 0.0
    %381 = vmatprep.subr.mxu0 0.0
    %382 = vmatpush1.msra.mxu0 0.0
    %383 = vmatprep.subr.mxu0 0.0
    %384 = vmatpush1.msra.mxu0 0.0
    %385 = vmatprep.subr.mxu0 0.0
    %386 = vmatpush1.msra.mxu0 0.0
    %387 = vmatprep.subr.mxu0 0.0
    %388 = vmatpush1.msra.mxu0 0.0
    %389 = vmatprep.subr.mxu0 0.0
    %390 = vmatpush1.msra.mxu0 0.0
    %391 = vmatprep.subr.mxu0 0.0
    %392 = vmatpush1.msra.mxu0 0.0
    %393 = vmatprep.subr.mxu0 0.0
    %394 = vmatpush1.msra.mxu0 0.0
    %395 = vmatprep.subr.mxu0 0.0
    %396 = vmatpush1.msra.mxu0 0.0
    %397 = vmatprep.subr.mxu0 0.0
    %398 = vmatpush1.msra.mxu0 0.0
    %399 = vmatprep.subr.mxu0 0.0
    %400 = vmatpush1.msra.mxu0 0.0
    %401 = vmatprep.subr.mxu0 0.0
    %402 = vmatpush1.msra.mxu0 0.0
    %403 = vmatprep.subr.mxu0 0.0
    %404 = vmatpush1.msra.mxu0 0.0
    %405 = vmatprep.subr.mxu0 0.0
    %406 = vmatpush1.msra.mxu0 0.0
    %407 = vmatprep.subr.mxu0 0.0
    %408 = vmatpush1.msra.mxu0 0.0
    %409 = vmatprep.mubr.f32.mxu0 0.0
    %410 = vmatmul.mubr.f32.gmra.mrb[0].mxu0 %v340
    %v411 = vpop.f32.mrb[0].mxu0
    %v412 = vadd.f32 %v337, %v411
    %v413 = vpop.f32.mrb[0].mxu0
    %414 = vmatprep.mubr.f32.mxu0 0.0
    %415 = vmatmul.mubr.f32.gmra.mrb[0].mxu0 %v343
    %v416 = vpop.f32.mrb[0].mxu0
    %v417 = vadd.f32 %v337, %v416
    %v418 = vpop.f32.mrb[0].mxu0
    %419 = vdwg.mxu0
    %421 = vrot.lane.b32.xlu0 %v234, 120
    %v422 = vpop.permute.xlu0 %421
    %423 = vrot.lane.b32.xlu0 %v234, 112
    %v424 = vpop.permute.xlu0 %423
    %425 = vrot.lane.b32.xlu0 %v234, 104
    %v426 = vpop.permute.xlu0 %425
    %428 = vrot.lane.b32.xlu0 %v235, 120
    %v429 = vpop.permute.xlu0 %428
    %430 = vrot.lane.b32.xlu0 %v235, 112
    %v431 = vpop.permute.xlu0 %430
    %432 = vrot.lane.b32.xlu0 %v235, 104
    %v433 = vpop.permute.xlu0 %432
    %435 = vrot.lane.b32.xlu0 %v320, 120
    %v436 = vpop.permute.xlu0 %435
    %437 = vrot.lane.b32.xlu0 %v320, 112
    %v438 = vpop.permute.xlu0 %437
    %439 = vrot.lane.b32.xlu0 %v320, 104
    %v440 = vpop.permute.xlu0 %439
    %442 = vrot.lane.b32.xlu0 %v325, 120
    %v443 = vpop.permute.xlu0 %442
    %444 = vrot.lane.b32.xlu0 %v325, 112
    %v445 = vpop.permute.xlu0 %444
    %446 = vrot.lane.b32.xlu0 %v325, 104
    %v447 = vpop.permute.xlu0 %446
    %449 = vrot.lane.b32.xlu0 %v412, 120
    %v450 = vpop.permute.xlu0 %449
    %452 = vrot.lane.b32.xlu0 %v412, 112
    %v453 = vpop.permute.xlu0 %452
    %455 = vrot.lane.b32.xlu0 %v412, 104
    %v456 = vpop.permute.xlu0 %455
    %459 = vrot.lane.b32.xlu0 %v417, 120
    %v460 = vpop.permute.xlu0 %459
    %462 = vrot.lane.b32.xlu0 %v417, 112
    %v463 = vpop.permute.xlu0 %462
    %465 = vrot.lane.b32.xlu0 %v417, 104
    %v466 = vpop.permute.xlu0 %465
    %vm468 = vcmask 64512
    %v469 = vsel %vm468, %v234, 0
    %v471 = vsel %vm468, %v320, 0
    %473 = vmatprep.subr.mxu0 0.0
    %474 = vmatpush1.xpose.msra.mxu0 %v471
    %475 = vmatprep.subr.mxu0 0.0
    %476 = vmatpush1.xpose.msra.mxu0 0.0
    %477 = vmatprep.subr.mxu0 0.0
    %478 = vmatpush1.xpose.msra.mxu0 0.0
    %479 = vmatprep.subr.mxu0 0.0
    %480 = vmatpush1.xpose.msra.mxu0 0.0
    %481 = vmatprep.subr.mxu0 0.0
    %482 = vmatpush1.xpose.msra.mxu0 0.0
    %483 = vmatprep.subr.mxu0 0.0
    %484 = vmatpush1.xpose.msra.mxu0 0.0
    %485 = vmatprep.subr.mxu0 0.0
    %486 = vmatpush1.xpose.msra.mxu0 0.0
    %487 = vmatprep.subr.mxu0 0.0
    %488 = vmatpush1.xpose.msra.mxu0 0.0
    %489 = vmatprep.subr.mxu0 0.0
    %490 = vmatpush1.xpose.msra.mxu0 0.0
    %491 = vmatprep.subr.mxu0 0.0
    %492 = vmatpush1.xpose.msra.mxu0 0.0
    %493 = vmatprep.subr.mxu0 0.0
    %494 = vmatpush1.xpose.msra.mxu0 0.0
    %495 = vmatprep.subr.mxu0 0.0
    %496 = vmatpush1.xpose.msra.mxu0 0.0
    %497 = vmatprep.subr.mxu0 0.0
    %498 = vmatpush1.xpose.msra.mxu0 0.0
    %499 = vmatprep.subr.mxu0 0.0
    %500 = vmatpush1.xpose.msra.mxu0 0.0
    %501 = vmatprep.subr.mxu0 0.0
    %502 = vmatpush1.xpose.msra.mxu0 0.0
    %503 = vmatprep.subr.mxu0 0.0
    %504 = vmatpush1.xpose.msra.mxu0 0.0
    %505 = vmatprep.subr.mxu0 0.0
    %506 = vmatpush1.xpose.msra.mxu0 0.0
    %507 = vmatprep.subr.mxu0 0.0
    %508 = vmatpush1.xpose.msra.mxu0 0.0
    %509 = vmatprep.subr.mxu0 0.0
    %510 = vmatpush1.xpose.msra.mxu0 0.0
    %511 = vmatprep.subr.mxu0 0.0
    %512 = vmatpush1.xpose.msra.mxu0 0.0
    %513 = vmatprep.subr.mxu0 0.0
    %514 = vmatpush1.xpose.msra.mxu0 0.0
    %515 = vmatprep.subr.mxu0 0.0
    %516 = vmatpush1.xpose.msra.mxu0 0.0
    %517 = vmatprep.subr.mxu0 0.0
    %518 = vmatpush1.xpose.msra.mxu0 0.0
    %519 = vmatprep.subr.mxu0 0.0
    %520 = vmatpush1.xpose.msra.mxu0 0.0
    %521 = vmatprep.subr.mxu0 0.0
    %522 = vmatpush1.xpose.msra.mxu0 0.0
    %523 = vmatprep.subr.mxu0 0.0
    %524 = vmatpush1.xpose.msra.mxu0 0.0
    %525 = vmatprep.subr.mxu0 0.0
    %526 = vmatpush1.xpose.msra.mxu0 0.0
    %527 = vmatprep.subr.mxu0 0.0
    %528 = vmatpush1.xpose.msra.mxu0 0.0
    %529 = vmatprep.subr.mxu0 0.0
    %530 = vmatpush1.xpose.msra.mxu0 0.0
    %531 = vmatprep.subr.mxu0 0.0
    %532 = vmatpush1.xpose.msra.mxu0 0.0
    %533 = vmatprep.subr.mxu0 0.0
    %534 = vmatpush1.xpose.msra.mxu0 0.0
    %535 = vmatprep.subr.mxu0 0.0
    %536 = vmatpush1.xpose.msra.mxu0 0.0
    %537 = vmatprep.mubr.f32.mxu0 0.0
    %538 = vmatmul.mubr.f32.gmra.mrb[0].mxu0 %v469
    %v539 = vpop.f32.mrb[0].mxu0
    %v540 = vadd.f32 0.0, %v539
    %v541 = vpop.f32.mrb[0].mxu0
    %542 = vdwg.mxu0
    %v543 = vsel %vm468, %v422, 0
    %v545 = vsel %vm468, %v436, 0
    %547 = vmatprep.subr.mxu0 0.0
    %548 = vmatpush1.xpose.msra.mxu0 %v545
    %549 = vmatprep.subr.mxu0 0.0
    %550 = vmatpush1.xpose.msra.mxu0 0.0
    %551 = vmatprep.subr.mxu0 0.0
    %552 = vmatpush1.xpose.msra.mxu0 0.0
    %553 = vmatprep.subr.mxu0 0.0
    %554 = vmatpush1.xpose.msra.mxu0 0.0
    %555 = vmatprep.subr.mxu0 0.0
    %556 = vmatpush1.xpose.msra.mxu0 0.0
    %557 = vmatprep.subr.mxu0 0.0
    %558 = vmatpush1.xpose.msra.mxu0 0.0
    %559 = vmatprep.subr.mxu0 0.0
    %560 = vmatpush1.xpose.msra.mxu0 0.0
    %561 = vmatprep.subr.mxu0 0.0
    %562 = vmatpush1.xpose.msra.mxu0 0.0
    %563 = vmatprep.subr.mxu0 0.0
    %564 = vmatpush1.xpose.msra.mxu0 0.0
    %565 = vmatprep.subr.mxu0 0.0
    %566 = vmatpush1.xpose.msra.mxu0 0.0
    %567 = vmatprep.subr.mxu0 0.0
    %568 = vmatpush1.xpose.msra.mxu0 0.0
    %569 = vmatprep.subr.mxu0 0.0
    %570 = vmatpush1.xpose.msra.mxu0 0.0
    %571 = vmatprep.subr.mxu0 0.0
    %572 = vmatpush1.xpose.msra.mxu0 0.0
    %573 = vmatprep.subr.mxu0 0.0
    %574 = vmatpush1.xpose.msra.mxu0 0.0
    %575 = vmatprep.subr.mxu0 0.0
    %576 = vmatpush1.xpose.msra.mxu0 0.0
    %577 = vmatprep.subr.mxu0 0.0
    %578 = vmatpush1.xpose.msra.mxu0 0.0
    %579 = vmatprep.subr.mxu0 0.0
    %580 = vmatpush1.xpose.msra.mxu0 0.0
    %581 = vmatprep.subr.mxu0 0.0
    %582 = vmatpush1.xpose.msra.mxu0 0.0
    %583 = vmatprep.subr.mxu0 0.0
    %584 = vmatpush1.xpose.msra.mxu0 0.0
    %585 = vmatprep.subr.mxu0 0.0
    %586 = vmatpush1.xpose.msra.mxu0 0.0
    %587 = vmatprep.subr.mxu0 0.0
    %588 = vmatpush1.xpose.msra.mxu0 0.0
    %589 = vmatprep.subr.mxu0 0.0
    %590 = vmatpush1.xpose.msra.mxu0 0.0
    %591 = vmatprep.subr.mxu0 0.0
    %592 = vmatpush1.xpose.msra.mxu0 0.0
    %593 = vmatprep.subr.mxu0 0.0
    %594 = vmatpush1.xpose.msra.mxu0 0.0
    %595 = vmatprep.subr.mxu0 0.0
    %596 = vmatpush1.xpose.msra.mxu0 0.0
    %597 = vmatprep.subr.mxu0 0.0
    %598 = vmatpush1.xpose.msra.mxu0 0.0
    %599 = vmatprep.subr.mxu0 0.0
    %600 = vmatpush1.xpose.msra.mxu0 0.0
    %601 = vmatprep.subr.mxu0 0.0
    %602 = vmatpush1.xpose.msra.mxu0 0.0
    %603 = vmatprep.subr.mxu0 0.0
    %604 = vmatpush1.xpose.msra.mxu0 0.0
    %605 = vmatprep.subr.mxu0 0.0
    %606 = vmatpush1.xpose.msra.mxu0 0.0
    %607 = vmatprep.subr.mxu0 0.0
    %608 = vmatpush1.xpose.msra.mxu0 0.0
    %609 = vmatprep.subr.mxu0 0.0
    %610 = vmatpush1.xpose.msra.mxu0 0.0
    %611 = vmatprep.mubr.f32.mxu0 0.0
    %612 = vmatmul.mubr.f32.gmra.mrb[0].mxu0 %v543
    %v613 = vpop.f32.mrb[0].mxu0
    %v614 = vadd.f32 0.0, %v613
    %v615 = vpop.f32.mrb[0].mxu0
    %616 = vdwg.mxu0
    %v617 = vsel %vm468, %v424, 0
    %v619 = vsel %vm468, %v438, 0
    %621 = vmatprep.subr.mxu0 0.0
    %622 = vmatpush1.xpose.msra.mxu0 %v619
    %623 = vmatprep.subr.mxu0 0.0
    %624 = vmatpush1.xpose.msra.mxu0 0.0
    %625 = vmatprep.subr.mxu0 0.0
    %626 = vmatpush1.xpose.msra.mxu0 0.0
    %627 = vmatprep.subr.mxu0 0.0
    %628 = vmatpush1.xpose.msra.mxu0 0.0
    %629 = vmatprep.subr.mxu0 0.0
    %630 = vmatpush1.xpose.msra.mxu0 0.0
    %631 = vmatprep.subr.mxu0 0.0
    %632 = vmatpush1.xpose.msra.mxu0 0.0
    %633 = vmatprep.subr.mxu0 0.0
    %634 = vmatpush1.xpose.msra.mxu0 0.0
    %635 = vmatprep.subr.mxu0 0.0
    %636 = vmatpush1.xpose.msra.mxu0 0.0
    %637 = vmatprep.subr.mxu0 0.0
    %638 = vmatpush1.xpose.msra.mxu0 0.0
    %639 = vmatprep.subr.mxu0 0.0
    %640 = vmatpush1.xpose.msra.mxu0 0.0
    %641 = vmatprep.subr.mxu0 0.0
    %642 = vmatpush1.xpose.msra.mxu0 0.0
    %643 = vmatprep.subr.mxu0 0.0
    %644 = vmatpush1.xpose.msra.mxu0 0.0
    %645 = vmatprep.subr.mxu0 0.0
    %646 = vmatpush1.xpose.msra.mxu0 0.0
    %647 = vmatprep.subr.mxu0 0.0
    %648 = vmatpush1.xpose.msra.mxu0 0.0
    %649 = vmatprep.subr.mxu0 0.0
    %650 = vmatpush1.xpose.msra.mxu0 0.0
    %651 = vmatprep.subr.mxu0 0.0
    %652 = vmatpush1.xpose.msra.mxu0 0.0
    %653 = vmatprep.subr.mxu0 0.0
    %654 = vmatpush1.xpose.msra.mxu0 0.0
    %655 = vmatprep.subr.mxu0 0.0
    %656 = vmatpush1.xpose.msra.mxu0 0.0
    %657 = vmatprep.subr.mxu0 0.0
    %658 = vmatpush1.xpose.msra.mxu0 0.0
    %659 = vmatprep.subr.mxu0 0.0
    %660 = vmatpush1.xpose.msra.mxu0 0.0
    %661 = vmatprep.subr.mxu0 0.0
    %662 = vmatpush1.xpose.msra.mxu0 0.0
    %663 = vmatprep.subr.mxu0 0.0
    %664 = vmatpush1.xpose.msra.mxu0 0.0
    %665 = vmatprep.subr.mxu0 0.0
    %666 = vmatpush1.xpose.msra.mxu0 0.0
    %667 = vmatprep.subr.mxu0 0.0
    %668 = vmatpush1.xpose.msra.mxu0 0.0
    %669 = vmatprep.subr.mxu0 0.0
    %670 = vmatpush1.xpose.msra.mxu0 0.0
    %671 = vmatprep.subr.mxu0 0.0
    %672 = vmatpush1.xpose.msra.mxu0 0.0
    %673 = vmatprep.subr.mxu0 0.0
    %674 = vmatpush1.xpose.msra.mxu0 0.0
    %675 = vmatprep.subr.mxu0 0.0
    %676 = vmatpush1.xpose.msra.mxu0 0.0
    %677 = vmatprep.subr.mxu0 0.0
    %678 = vmatpush1.xpose.msra.mxu0 0.0
    %679 = vmatprep.subr.mxu0 0.0
    %680 = vmatpush1.xpose.msra.mxu0 0.0
    %681 = vmatprep.subr.mxu0 0.0
    %682 = vmatpush1.xpose.msra.mxu0 0.0
    %683 = vmatprep.subr.mxu0 0.0
    %684 = vmatpush1.xpose.msra.mxu0 0.0
    %685 = vmatprep.mubr.f32.mxu0 0.0
    %686 = vmatmul.mubr.f32.gmra.mrb[0].mxu0 %v617
    %v687 = vpop.f32.mrb[0].mxu0
    %v688 = vadd.f32 0.0, %v687
    %v689 = vpop.f32.mrb[0].mxu0
    %690 = vdwg.mxu0
    %v691 = vsel %vm468, %v426, 0
    %v693 = vsel %vm468, %v440, 0
    %695 = vmatprep.subr.mxu0 0.0
    %696 = vmatpush1.xpose.msra.mxu0 %v693
    %697 = vmatprep.subr.mxu0 0.0
    %698 = vmatpush1.xpose.msra.mxu0 0.0
    %699 = vmatprep.subr.mxu0 0.0
    %700 = vmatpush1.xpose.msra.mxu0 0.0
    %701 = vmatprep.subr.mxu0 0.0
    %702 = vmatpush1.xpose.msra.mxu0 0.0
    %703 = vmatprep.subr.mxu0 0.0
    %704 = vmatpush1.xpose.msra.mxu0 0.0
    %705 = vmatprep.subr.mxu0 0.0
    %706 = vmatpush1.xpose.msra.mxu0 0.0
    %707 = vmatprep.subr.mxu0 0.0
    %708 = vmatpush1.xpose.msra.mxu0 0.0
    %709 = vmatprep.subr.mxu0 0.0
    %710 = vmatpush1.xpose.msra.mxu0 0.0
    %711 = vmatprep.subr.mxu0 0.0
    %712 = vmatpush1.xpose.msra.mxu0 0.0
    %713 = vmatprep.subr.mxu0 0.0
    %714 = vmatpush1.xpose.msra.mxu0 0.0
    %715 = vmatprep.subr.mxu0 0.0
    %716 = vmatpush1.xpose.msra.mxu0 0.0
    %717 = vmatprep.subr.mxu0 0.0
    %718 = vmatpush1.xpose.msra.mxu0 0.0
    %719 = vmatprep.subr.mxu0 0.0
    %720 = vmatpush1.xpose.msra.mxu0 0.0
    %721 = vmatprep.subr.mxu0 0.0
    %722 = vmatpush1.xpose.msra.mxu0 0.0
    %723 = vmatprep.subr.mxu0 0.0
    %724 = vmatpush1.xpose.msra.mxu0 0.0
    %725 = vmatprep.subr.mxu0 0.0
    %726 = vmatpush1.xpose.msra.mxu0 0.0
    %727 = vmatprep.subr.mxu0 0.0
    %728 = vmatpush1.xpose.msra.mxu0 0.0
    %729 = vmatprep.subr.mxu0 0.0
    %730 = vmatpush1.xpose.msra.mxu0 0.0
    %731 = vmatprep.subr.mxu0 0.0
    %732 = vmatpush1.xpose.msra.mxu0 0.0
    %733 = vmatprep.subr.mxu0 0.0
    %734 = vmatpush1.xpose.msra.mxu0 0.0
    %735 = vmatprep.subr.mxu0 0.0
    %736 = vmatpush1.xpose.msra.mxu0 0.0
    %737 = vmatprep.subr.mxu0 0.0
    %738 = vmatpush1.xpose.msra.mxu0 0.0
    %739 = vmatprep.subr.mxu0 0.0
    %740 = vmatpush1.xpose.msra.mxu0 0.0
    %741 = vmatprep.subr.mxu0 0.0
    %742 = vmatpush1.xpose.msra.mxu0 0.0
    %743 = vmatprep.subr.mxu0 0.0
    %744 = vmatpush1.xpose.msra.mxu0 0.0
    %745 = vmatprep.subr.mxu0 0.0
    %746 = vmatpush1.xpose.msra.mxu0 0.0
    %747 = vmatprep.subr.mxu0 0.0
    %748 = vmatpush1.xpose.msra.mxu0 0.0
    %749 = vmatprep.subr.mxu0 0.0
    %750 = vmatpush1.xpose.msra.mxu0 0.0
    %751 = vmatprep.subr.mxu0 0.0
    %752 = vmatpush1.xpose.msra.mxu0 0.0
    %753 = vmatprep.subr.mxu0 0.0
    %754 = vmatpush1.xpose.msra.mxu0 0.0
    %755 = vmatprep.subr.mxu0 0.0
    %756 = vmatpush1.xpose.msra.mxu0 0.0
    %757 = vmatprep.subr.mxu0 0.0
    %758 = vmatpush1.xpose.msra.mxu0 0.0
    %759 = vmatprep.mubr.f32.mxu0 0.0
    %760 = vmatmul.mubr.f32.gmra.mrb[0].mxu0 %v691
    %v761 = vpop.f32.mrb[0].mxu0
    %v762 = vadd.f32 0.0, %v761
    %v763 = vpop.f32.mrb[0].mxu0
    %764 = vdwg.mxu0
    %v765 = vsel %vm468, %v235, 0
    %v767 = vsel %vm468, %v325, 0
    %769 = vmatprep.subr.mxu0 0.0
    %770 = vmatpush1.xpose.msra.mxu0 %v767
    %771 = vmatprep.subr.mxu0 0.0
    %772 = vmatpush1.xpose.msra.mxu0 0.0
    %773 = vmatprep.subr.mxu0 0.0
    %774 = vmatpush1.xpose.msra.mxu0 0.0
    %775 = vmatprep.subr.mxu0 0.0
    %776 = vmatpush1.xpose.msra.mxu0 0.0
    %777 = vmatprep.subr.mxu0 0.0
    %778 = vmatpush1.xpose.msra.mxu0 0.0
    %779 = vmatprep.subr.mxu0 0.0
    %780 = vmatpush1.xpose.msra.mxu0 0.0
    %781 = vmatprep.subr.mxu0 0.0
    %782 = vmatpush1.xpose.msra.mxu0 0.0
    %783 = vmatprep.subr.mxu0 0.0
    %784 = vmatpush1.xpose.msra.mxu0 0.0
    %785 = vmatprep.subr.mxu0 0.0
    %786 = vmatpush1.xpose.msra.mxu0 0.0
    %787 = vmatprep.subr.mxu0 0.0
    %788 = vmatpush1.xpose.msra.mxu0 0.0
    %789 = vmatprep.subr.mxu0 0.0
    %790 = vmatpush1.xpose.msra.mxu0 0.0
    %791 = vmatprep.subr.mxu0 0.0
    %792 = vmatpush1.xpose.msra.mxu0 0.0
    %793 = vmatprep.subr.mxu0 0.0
    %794 = vmatpush1.xpose.msra.mxu0 0.0
    %795 = vmatprep.subr.mxu0 0.0
    %796 = vmatpush1.xpose.msra.mxu0 0.0
    %797 = vmatprep.subr.mxu0 0.0
    %798 = vmatpush1.xpose.msra.mxu0 0.0
    %799 = vmatprep.subr.mxu0 0.0
    %800 = vmatpush1.xpose.msra.mxu0 0.0
    %801 = vmatprep.subr.mxu0 0.0
    %802 = vmatpush1.xpose.msra.mxu0 0.0
    %803 = vmatprep.subr.mxu0 0.0
    %804 = vmatpush1.xpose.msra.mxu0 0.0
    %805 = vmatprep.subr.mxu0 0.0
    %806 = vmatpush1.xpose.msra.mxu0 0.0
    %807 = vmatprep.subr.mxu0 0.0
    %808 = vmatpush1.xpose.msra.mxu0 0.0
    %809 = vmatprep.subr.mxu0 0.0
    %810 = vmatpush1.xpose.msra.mxu0 0.0
    %811 = vmatprep.subr.mxu0 0.0
    %812 = vmatpush1.xpose.msra.mxu0 0.0
    %813 = vmatprep.subr.mxu0 0.0
    %814 = vmatpush1.xpose.msra.mxu0 0.0
    %815 = vmatprep.subr.mxu0 0.0
    %816 = vmatpush1.xpose.msra.mxu0 0.0
    %817 = vmatprep.subr.mxu0 0.0
    %818 = vmatpush1.xpose.msra.mxu0 0.0
    %819 = vmatprep.subr.mxu0 0.0
    %820 = vmatpush1.xpose.msra.mxu0 0.0
    %821 = vmatprep.subr.mxu0 0.0
    %822 = vmatpush1.xpose.msra.mxu0 0.0
    %823 = vmatprep.subr.mxu0 0.0
    %824 = vmatpush1.xpose.msra.mxu0 0.0
    %825 = vmatprep.subr.mxu0 0.0
    %826 = vmatpush1.xpose.msra.mxu0 0.0
    %827 = vmatprep.subr.mxu0 0.0
    %828 = vmatpush1.xpose.msra.mxu0 0.0
    %829 = vmatprep.subr.mxu0 0.0
    %830 = vmatpush1.xpose.msra.mxu0 0.0
    %831 = vmatprep.subr.mxu0 0.0
    %832 = vmatpush1.xpose.msra.mxu0 0.0
    %833 = vmatprep.mubr.f32.mxu0 0.0
    %834 = vmatmul.mubr.f32.gmra.mrb[0].mxu0 %v765
    %v835 = vpop.f32.mrb[0].mxu0
    %v836 = vadd.f32 0.0, %v835
    %v837 = vpop.f32.mrb[0].mxu0
    %838 = vdwg.mxu0
    %v839 = vsel %vm468, %v429, 0
    %v841 = vsel %vm468, %v443, 0
    %843 = vmatprep.subr.mxu0 0.0
    %844 = vmatpush1.xpose.msra.mxu0 %v841
    %845 = vmatprep.subr.mxu0 0.0
    %846 = vmatpush1.xpose.msra.mxu0 0.0
    %847 = vmatprep.subr.mxu0 0.0
    %848 = vmatpush1.xpose.msra.mxu0 0.0
    %849 = vmatprep.subr.mxu0 0.0
    %850 = vmatpush1.xpose.msra.mxu0 0.0
    %851 = vmatprep.subr.mxu0 0.0
    %852 = vmatpush1.xpose.msra.mxu0 0.0
    %853 = vmatprep.subr.mxu0 0.0
    %854 = vmatpush1.xpose.msra.mxu0 0.0
    %855 = vmatprep.subr.mxu0 0.0
    %856 = vmatpush1.xpose.msra.mxu0 0.0
    %857 = vmatprep.subr.mxu0 0.0
    %858 = vmatpush1.xpose.msra.mxu0 0.0
    %859 = vmatprep.subr.mxu0 0.0
    %860 = vmatpush1.xpose.msra.mxu0 0.0
    %861 = vmatprep.subr.mxu0 0.0
    %862 = vmatpush1.xpose.msra.mxu0 0.0
    %863 = vmatprep.subr.mxu0 0.0
    %864 = vmatpush1.xpose.msra.mxu0 0.0
    %865 = vmatprep.subr.mxu0 0.0
    %866 = vmatpush1.xpose.msra.mxu0 0.0
    %867 = vmatprep.subr.mxu0 0.0
    %868 = vmatpush1.xpose.msra.mxu0 0.0
    %869 = vmatprep.subr.mxu0 0.0
    %870 = vmatpush1.xpose.msra.mxu0 0.0
    %871 = vmatprep.subr.mxu0 0.0
    %872 = vmatpush1.xpose.msra.mxu0 0.0
    %873 = vmatprep.subr.mxu0 0.0
    %874 = vmatpush1.xpose.msra.mxu0 0.0
    %875 = vmatprep.subr.mxu0 0.0
    %876 = vmatpush1.xpose.msra.mxu0 0.0
    %877 = vmatprep.subr.mxu0 0.0
    %878 = vmatpush1.xpose.msra.mxu0 0.0
    %879 = vmatprep.subr.mxu0 0.0
    %880 = vmatpush1.xpose.msra.mxu0 0.0
    %881 = vmatprep.subr.mxu0 0.0
    %882 = vmatpush1.xpose.msra.mxu0 0.0
    %883 = vmatprep.subr.mxu0 0.0
    %884 = vmatpush1.xpose.msra.mxu0 0.0
    %885 = vmatprep.subr.mxu0 0.0
    %886 = vmatpush1.xpose.msra.mxu0 0.0
    %887 = vmatprep.subr.mxu0 0.0
    %888 = vmatpush1.xpose.msra.mxu0 0.0
    %889 = vmatprep.subr.mxu0 0.0
    %890 = vmatpush1.xpose.msra.mxu0 0.0
    %891 = vmatprep.subr.mxu0 0.0
    %892 = vmatpush1.xpose.msra.mxu0 0.0
    %893 = vmatprep.subr.mxu0 0.0
    %894 = vmatpush1.xpose.msra.mxu0 0.0
    %895 = vmatprep.subr.mxu0 0.0
    %896 = vmatpush1.xpose.msra.mxu0 0.0
    %897 = vmatprep.subr.mxu0 0.0
    %898 = vmatpush1.xpose.msra.mxu0 0.0
    %899 = vmatprep.subr.mxu0 0.0
    %900 = vmatpush1.xpose.msra.mxu0 0.0
    %901 = vmatprep.subr.mxu0 0.0
    %902 = vmatpush1.xpose.msra.mxu0 0.0
    %903 = vmatprep.subr.mxu0 0.0
    %904 = vmatpush1.xpose.msra.mxu0 0.0
    %905 = vmatprep.subr.mxu0 0.0
    %906 = vmatpush1.xpose.msra.mxu0 0.0
    %907 = vmatprep.mubr.f32.mxu0 0.0
    %908 = vmatmul.mubr.f32.gmra.mrb[0].mxu0 %v839
    %v909 = vpop.f32.mrb[0].mxu0
    %v910 = vadd.f32 0.0, %v909
    %v911 = vpop.f32.mrb[0].mxu0
    %912 = vdwg.mxu0
    %v913 = vsel %vm468, %v431, 0
    %v915 = vsel %vm468, %v445, 0
    %917 = vmatprep.subr.mxu0 0.0
    %918 = vmatpush1.xpose.msra.mxu0 %v915
    %919 = vmatprep.subr.mxu0 0.0
    %920 = vmatpush1.xpose.msra.mxu0 0.0
    %921 = vmatprep.subr.mxu0 0.0
    %922 = vmatpush1.xpose.msra.mxu0 0.0
    %923 = vmatprep.subr.mxu0 0.0
    %924 = vmatpush1.xpose.msra.mxu0 0.0
    %925 = vmatprep.subr.mxu0 0.0
    %926 = vmatpush1.xpose.msra.mxu0 0.0
    %927 = vmatprep.subr.mxu0 0.0
    %928 = vmatpush1.xpose.msra.mxu0 0.0
    %929 = vmatprep.subr.mxu0 0.0
    %930 = vmatpush1.xpose.msra.mxu0 0.0
    %931 = vmatprep.subr.mxu0 0.0
    %932 = vmatpush1.xpose.msra.mxu0 0.0
    %933 = vmatprep.subr.mxu0 0.0
    %934 = vmatpush1.xpose.msra.mxu0 0.0
    %935 = vmatprep.subr.mxu0 0.0
    %936 = vmatpush1.xpose.msra.mxu0 0.0
    %937 = vmatprep.subr.mxu0 0.0
    %938 = vmatpush1.xpose.msra.mxu0 0.0
    %939 = vmatprep.subr.mxu0 0.0
    %940 = vmatpush1.xpose.msra.mxu0 0.0
    %941 = vmatprep.subr.mxu0 0.0
    %942 = vmatpush1.xpose.msra.mxu0 0.0
    %943 = vmatprep.subr.mxu0 0.0
    %944 = vmatpush1.xpose.msra.mxu0 0.0
    %945 = vmatprep.subr.mxu0 0.0
    %946 = vmatpush1.xpose.msra.mxu0 0.0
    %947 = vmatprep.subr.mxu0 0.0
    %948 = vmatpush1.xpose.msra.mxu0 0.0
    %949 = vmatprep.subr.mxu0 0.0
    %950 = vmatpush1.xpose.msra.mxu0 0.0
    %951 = vmatprep.subr.mxu0 0.0
    %952 = vmatpush1.xpose.msra.mxu0 0.0
    %953 = vmatprep.subr.mxu0 0.0
    %954 = vmatpush1.xpose.msra.mxu0 0.0
    %955 = vmatprep.subr.mxu0 0.0
    %956 = vmatpush1.xpose.msra.mxu0 0.0
    %957 = vmatprep.subr.mxu0 0.0
    %958 = vmatpush1.xpose.msra.mxu0 0.0
    %959 = vmatprep.subr.mxu0 0.0
    %960 = vmatpush1.xpose.msra.mxu0 0.0
    %961 = vmatprep.subr.mxu0 0.0
    %962 = vmatpush1.xpose.msra.mxu0 0.0
    %963 = vmatprep.subr.mxu0 0.0
    %964 = vmatpush1.xpose.msra.mxu0 0.0
    %965 = vmatprep.subr.mxu0 0.0
    %966 = vmatpush1.xpose.msra.mxu0 0.0
    %967 = vmatprep.subr.mxu0 0.0
    %968 = vmatpush1.xpose.msra.mxu0 0.0
    %969 = vmatprep.subr.mxu0 0.0
    %970 = vmatpush1.xpose.msra.mxu0 0.0
    %971 = vmatprep.subr.mxu0 0.0
    %972 = vmatpush1.xpose.msra.mxu0 0.0
    %973 = vmatprep.subr.mxu0 0.0
    %974 = vmatpush1.xpose.msra.mxu0 0.0
    %975 = vmatprep.subr.mxu0 0.0
    %976 = vmatpush1.xpose.msra.mxu0 0.0
    %977 = vmatprep.subr.mxu0 0.0
    %978 = vmatpush1.xpose.msra.mxu0 0.0
    %979 = vmatprep.subr.mxu0 0.0
    %980 = vmatpush1.xpose.msra.mxu0 0.0
    %981 = vmatprep.mubr.f32.mxu0 0.0
    %982 = vmatmul.mubr.f32.gmra.mrb[0].mxu0 %v913
    %v983 = vpop.f32.mrb[0].mxu0
    %v984 = vadd.f32 0.0, %v983
    %v985 = vpop.f32.mrb[0].mxu0
    %986 = vdwg.mxu0
    %v987 = vsel %vm468, %v433, 0
    %v989 = vsel %vm468, %v447, 0
    %991 = vmatprep.subr.mxu0 0.0
    %992 = vmatpush1.xpose.msra.mxu0 %v989
    %993 = vmatprep.subr.mxu0 0.0
    %994 = vmatpush1.xpose.msra.mxu0 0.0
    %995 = vmatprep.subr.mxu0 0.0
    %996 = vmatpush1.xpose.msra.mxu0 0.0
    %997 = vmatprep.subr.mxu0 0.0
    %998 = vmatpush1.xpose.msra.mxu0 0.0
    %999 = vmatprep.subr.mxu0 0.0
    %1000 = vmatpush1.xpose.msra.mxu0 0.0
    %1001 = vmatprep.subr.mxu0 0.0
    %1002 = vmatpush1.xpose.msra.mxu0 0.0
    %1003 = vmatprep.subr.mxu0 0.0
    %1004 = vmatpush1.xpose.msra.mxu0 0.0
    %1005 = vmatprep.subr.mxu0 0.0
    %1006 = vmatpush1.xpose.msra.mxu0 0.0
    %1007 = vmatprep.subr.mxu0 0.0
    %1008 = vmatpush1.xpose.msra.mxu0 0.0
    %1009 = vmatprep.subr.mxu0 0.0
    %1010 = vmatpush1.xpose.msra.mxu0 0.0
    %1011 = vmatprep.subr.mxu0 0.0
    %1012 = vmatpush1.xpose.msra.mxu0 0.0
    %1013 = vmatprep.subr.mxu0 0.0
    %1014 = vmatpush1.xpose.msra.mxu0 0.0
    %1015 = vmatprep.subr.mxu0 0.0
    %1016 = vmatpush1.xpose.msra.mxu0 0.0
    %1017 = vmatprep.subr.mxu0 0.0
    %1018 = vmatpush1.xpose.msra.mxu0 0.0
    %1019 = vmatprep.subr.mxu0 0.0
    %1020 = vmatpush1.xpose.msra.mxu0 0.0
    %1021 = vmatprep.subr.mxu0 0.0
    %1022 = vmatpush1.xpose.msra.mxu0 0.0
    %1023 = vmatprep.subr.mxu0 0.0
    %1024 = vmatpush1.xpose.msra.mxu0 0.0
    %1025 = vmatprep.subr.mxu0 0.0
    %1026 = vmatpush1.xpose.msra.mxu0 0.0
    %1027 = vmatprep.subr.mxu0 0.0
    %1028 = vmatpush1.xpose.msra.mxu0 0.0
    %1029 = vmatprep.subr.mxu0 0.0
    %1030 = vmatpush1.xpose.msra.mxu0 0.0
    %1031 = vmatprep.subr.mxu0 0.0
    %1032 = vmatpush1.xpose.msra.mxu0 0.0
    %1033 = vmatprep.subr.mxu0 0.0
    %1034 = vmatpush1.xpose.msra.mxu0 0.0
    %1035 = vmatprep.subr.mxu0 0.0
    %1036 = vmatpush1.xpose.msra.mxu0 0.0
    %1037 = vmatprep.subr.mxu0 0.0
    %1038 = vmatpush1.xpose.msra.mxu0 0.0
    %1039 = vmatprep.subr.mxu0 0.0
    %1040 = vmatpush1.xpose.msra.mxu0 0.0
    %1041 = vmatprep.subr.mxu0 0.0
    %1042 = vmatpush1.xpose.msra.mxu0 0.0
    %1043 = vmatprep.subr.mxu0 0.0
    %1044 = vmatpush1.xpose.msra.mxu0 0.0
    %1045 = vmatprep.subr.mxu0 0.0
    %1046 = vmatpush1.xpose.msra.mxu0 0.0
    %1047 = vmatprep.subr.mxu0 0.0
    %1048 = vmatpush1.xpose.msra.mxu0 0.0
    %1049 = vmatprep.subr.mxu0 0.0
    %1050 = vmatpush1.xpose.msra.mxu0 0.0
    %1051 = vmatprep.subr.mxu0 0.0
    %1052 = vmatpush1.xpose.msra.mxu0 0.0
    %1053 = vmatprep.subr.mxu0 0.0
    %1054 = vmatpush1.xpose.msra.mxu0 0.0
    %1055 = vmatprep.mubr.f32.mxu0 0.0
    %1056 = vmatmul.mubr.f32.gmra.mrb[0].mxu0 %v987
    %v1057 = vpop.f32.mrb[0].mxu0
    %v1058 = vadd.f32 0.0, %v1057
    %v1059 = vpop.f32.mrb[0].mxu0
    %1060 = vdwg.mxu0
    %v1061 = vsel %vm468, %v540, -inf
    %1062 = vmax.xlane.f32.xlu0 %v1061
    %v1063 = vpop.xlane.xlu0 %1062
    %v1064 = vsel %vm468, %v614, -inf
    %1065 = vmax.xlane.f32.xlu0 %v1064
    %v1066 = vpop.xlane.xlu0 %1065
    %v1067 = vsel %vm468, %v688, -inf
    %1068 = vmax.xlane.f32.xlu0 %v1067
    %v1069 = vpop.xlane.xlu0 %1068
    %v1070 = vsel %vm468, %v762, -inf
    %1071 = vmax.xlane.f32.xlu0 %v1070
    %v1072 = vpop.xlane.xlu0 %1071
    %v1073 = vsel %vm468, %v836, -inf
    %1074 = vmax.xlane.f32.xlu0 %v1073
    %v1075 = vpop.xlane.xlu0 %1074
    %v1076 = vsel %vm468, %v910, -inf
    %1077 = vmax.xlane.f32.xlu0 %v1076
    %v1078 = vpop.xlane.xlu0 %1077
    %v1079 = vsel %vm468, %v984, -inf
    %1080 = vmax.xlane.f32.xlu0 %v1079
    %v1081 = vpop.xlane.xlu0 %1080
    %v1082 = vsel %vm468, %v1058, -inf
    %1083 = vmax.xlane.f32.xlu0 %v1082
    %v1084 = vpop.xlane.xlu0 %1083
    %v1085 = vsub.f32 %v540, %v1063
    %v1086 = vsub.f32 %v614, %v1066
    %v1087 = vsub.f32 %v688, %v1069
    %v1088 = vsub.f32 %v762, %v1072
    %v1089 = vsub.f32 %v836, %v1075
    %v1090 = vsub.f32 %v910, %v1078
    %v1091 = vsub.f32 %v984, %v1081
    %v1092 = vsub.f32 %v1058, %v1084
    %v1093 = vmul.f32 %v1085, 1.442695
    %v1094 = vpow.pop %v1093
    %v1095 = vmul.f32 %v1086, 1.442695
    %v1096 = vpow.pop %v1095
    %v1097 = vmul.f32 %v1087, 1.442695
    %v1098 = vpow.pop %v1097
    %v1099 = vmul.f32 %v1088, 1.442695
    %v1100 = vpow.pop %v1099
    %v1101 = vmul.f32 %v1089, 1.442695
    %v1102 = vpow.pop %v1101
    %v1103 = vmul.f32 %v1090, 1.442695
    %v1104 = vpow.pop %v1103
    %v1105 = vmul.f32 %v1091, 1.442695
    %v1106 = vpow.pop %v1105
    %v1107 = vmul.f32 %v1092, 1.442695
    %v1108 = vpow.pop %v1107
    %v1109 = vsel %vm468, %v1094, 0.0
    %1110 = vadd.xlane.f32.xlu0 %v1109
    %v1111 = vpop.xlane.xlu0 %1110
    %v1112 = vsel %vm468, %v1096, 0.0
    %1113 = vadd.xlane.f32.xlu0 %v1112
    %v1114 = vpop.xlane.xlu0 %1113
    %v1115 = vsel %vm468, %v1098, 0.0
    %1116 = vadd.xlane.f32.xlu0 %v1115
    %v1117 = vpop.xlane.xlu0 %1116
    %v1118 = vsel %vm468, %v1100, 0.0
    %1119 = vadd.xlane.f32.xlu0 %v1118
    %v1120 = vpop.xlane.xlu0 %1119
    %v1121 = vsel %vm468, %v1102, 0.0
    %1122 = vadd.xlane.f32.xlu0 %v1121
    %v1123 = vpop.xlane.xlu0 %1122
    %v1124 = vsel %vm468, %v1104, 0.0
    %1125 = vadd.xlane.f32.xlu0 %v1124
    %v1126 = vpop.xlane.xlu0 %1125
    %v1127 = vsel %vm468, %v1106, 0.0
    %1128 = vadd.xlane.f32.xlu0 %v1127
    %v1129 = vpop.xlane.xlu0 %1128
    %v1130 = vsel %vm468, %v1108, 0.0
    %1131 = vadd.xlane.f32.xlu0 %v1130
    %v1132 = vpop.xlane.xlu0 %1131
    %v1133 = vrcp.pop %v1111
    %v1134 = vrcp.pop %v1114
    %v1135 = vrcp.pop %v1117
    %v1136 = vrcp.pop %v1120
    %v1137 = vrcp.pop %v1123
    %v1138 = vrcp.pop %v1126
    %v1139 = vrcp.pop %v1129
    %v1140 = vrcp.pop %v1132
    %v1141 = vmul.f32 %v1094, %v1133
    %v1142 = vmul.f32 %v1096, %v1134
    %v1143 = vmul.f32 %v1098, %v1135
    %v1144 = vmul.f32 %v1100, %v1136
    %v1145 = vmul.f32 %v1102, %v1137
    %v1146 = vmul.f32 %v1104, %v1138
    %v1147 = vmul.f32 %v1106, %v1139
    %v1148 = vmul.f32 %v1108, %v1140
    %v1150 = vsel %vm468, %v1141, 0
    %1152 = vmatprep.subr.mxu0 0.0
    %1153 = vmatpush1.msra.mxu0 %v412
    %1154 = vmatprep.subr.mxu0 0.0
    %1155 = vmatpush1.msra.mxu0 0.0
    %1156 = vmatprep.subr.mxu0 0.0
    %1157 = vmatpush1.msra.mxu0 0.0
    %1158 = vmatprep.subr.mxu0 0.0
    %1159 = vmatpush1.msra.mxu0 0.0
    %1160 = vmatprep.subr.mxu0 0.0
    %1161 = vmatpush1.msra.mxu0 0.0
    %1162 = vmatprep.subr.mxu0 0.0
    %1163 = vmatpush1.msra.mxu0 0.0
    %1164 = vmatprep.subr.mxu0 0.0
    %1165 = vmatpush1.msra.mxu0 0.0
    %1166 = vmatprep.subr.mxu0 0.0
    %1167 = vmatpush1.msra.mxu0 0.0
    %1168 = vmatprep.subr.mxu0 0.0
    %1169 = vmatpush1.msra.mxu0 0.0
    %1170 = vmatprep.subr.mxu0 0.0
    %1171 = vmatpush1.msra.mxu0 0.0
    %1172 = vmatprep.subr.mxu0 0.0
    %1173 = vmatpush1.msra.mxu0 0.0
    %1174 = vmatprep.subr.mxu0 0.0
    %1175 = vmatpush1.msra.mxu0 0.0
    %1176 = vmatprep.subr.mxu0 0.0
    %1177 = vmatpush1.msra.mxu0 0.0
    %1178 = vmatprep.subr.mxu0 0.0
    %1179 = vmatpush1.msra.mxu0 0.0
    %1180 = vmatprep.subr.mxu0 0.0
    %1181 = vmatpush1.msra.mxu0 0.0
    %1182 = vmatprep.subr.mxu0 0.0
    %1183 = vmatpush1.msra.mxu0 0.0
    %1184 = vmatprep.subr.mxu0 0.0
    %1185 = vmatpush1.msra.mxu0 0.0
    %1186 = vmatprep.subr.mxu0 0.0
    %1187 = vmatpush1.msra.mxu0 0.0
    %1188 = vmatprep.subr.mxu0 0.0
    %1189 = vmatpush1.msra.mxu0 0.0
    %1190 = vmatprep.subr.mxu0 0.0
    %1191 = vmatpush1.msra.mxu0 0.0
    %1192 = vmatprep.subr.mxu0 0.0
    %1193 = vmatpush1.msra.mxu0 0.0
    %1194 = vmatprep.subr.mxu0 0.0
    %1195 = vmatpush1.msra.mxu0 0.0
    %1196 = vmatprep.subr.mxu0 0.0
    %1197 = vmatpush1.msra.mxu0 0.0
    %1198 = vmatprep.subr.mxu0 0.0
    %1199 = vmatpush1.msra.mxu0 0.0
    %1200 = vmatprep.subr.mxu0 0.0
    %1201 = vmatpush1.msra.mxu0 0.0
    %1202 = vmatprep.subr.mxu0 0.0
    %1203 = vmatpush1.msra.mxu0 0.0
    %1204 = vmatprep.subr.mxu0 0.0
    %1205 = vmatpush1.msra.mxu0 0.0
    %1206 = vmatprep.subr.mxu0 0.0
    %1207 = vmatpush1.msra.mxu0 0.0
    %1208 = vmatprep.subr.mxu0 0.0
    %1209 = vmatpush1.msra.mxu0 0.0
    %1210 = vmatprep.subr.mxu0 0.0
    %1211 = vmatpush1.msra.mxu0 0.0
    %1212 = vmatprep.subr.mxu0 0.0
    %1213 = vmatpush1.msra.mxu0 0.0
    %1214 = vmatprep.subr.mxu0 0.0
    %1215 = vmatpush1.msra.mxu0 0.0
    %1216 = vmatprep.mubr.f32.mxu0 0.0
    %1217 = vmatmul.mubr.f32.gmra.mrb[0].mxu0 %v1150
    %v1218 = vpop.f32.mrb[0].mxu0
    %v1219 = vadd.f32 0.0, %v1218
    %v1220 = vpop.f32.mrb[0].mxu0
    %1221 = vdwg.mxu0
    %v1223 = vsel %vm468, %v1142, 0
    %1225 = vmatprep.subr.mxu0 0.0
    %1226 = vmatpush1.msra.mxu0 %v450
    %1227 = vmatprep.subr.mxu0 0.0
    %1228 = vmatpush1.msra.mxu0 0.0
    %1229 = vmatprep.subr.mxu0 0.0
    %1230 = vmatpush1.msra.mxu0 0.0
    %1231 = vmatprep.subr.mxu0 0.0
    %1232 = vmatpush1.msra.mxu0 0.0
    %1233 = vmatprep.subr.mxu0 0.0
    %1234 = vmatpush1.msra.mxu0 0.0
    %1235 = vmatprep.subr.mxu0 0.0
    %1236 = vmatpush1.msra.mxu0 0.0
    %1237 = vmatprep.subr.mxu0 0.0
    %1238 = vmatpush1.msra.mxu0 0.0
    %1239 = vmatprep.subr.mxu0 0.0
    %1240 = vmatpush1.msra.mxu0 0.0
    %1241 = vmatprep.subr.mxu0 0.0
    %1242 = vmatpush1.msra.mxu0 0.0
    %1243 = vmatprep.subr.mxu0 0.0
    %1244 = vmatpush1.msra.mxu0 0.0
    %1245 = vmatprep.subr.mxu0 0.0
    %1246 = vmatpush1.msra.mxu0 0.0
    %1247 = vmatprep.subr.mxu0 0.0
    %1248 = vmatpush1.msra.mxu0 0.0
    %1249 = vmatprep.subr.mxu0 0.0
    %1250 = vmatpush1.msra.mxu0 0.0
    %1251 = vmatprep.subr.mxu0 0.0
    %1252 = vmatpush1.msra.mxu0 0.0
    %1253 = vmatprep.subr.mxu0 0.0
    %1254 = vmatpush1.msra.mxu0 0.0
    %1255 = vmatprep.subr.mxu0 0.0
    %1256 = vmatpush1.msra.mxu0 0.0
    %1257 = vmatprep.subr.mxu0 0.0
    %1258 = vmatpush1.msra.mxu0 0.0
    %1259 = vmatprep.subr.mxu0 0.0
    %1260 = vmatpush1.msra.mxu0 0.0
    %1261 = vmatprep.subr.mxu0 0.0
    %1262 = vmatpush1.msra.mxu0 0.0
    %1263 = vmatprep.subr.mxu0 0.0
    %1264 = vmatpush1.msra.mxu0 0.0
    %1265 = vmatprep.subr.mxu0 0.0
    %1266 = vmatpush1.msra.mxu0 0.0
    %1267 = vmatprep.subr.mxu0 0.0
    %1268 = vmatpush1.msra.mxu0 0.0
    %1269 = vmatprep.subr.mxu0 0.0
    %1270 = vmatpush1.msra.mxu0 0.0
    %1271 = vmatprep.subr.mxu0 0.0
    %1272 = vmatpush1.msra.mxu0 0.0
    %1273 = vmatprep.subr.mxu0 0.0
    %1274 = vmatpush1.msra.mxu0 0.0
    %1275 = vmatprep.subr.mxu0 0.0
    %1276 = vmatpush1.msra.mxu0 0.0
    %1277 = vmatprep.subr.mxu0 0.0
    %1278 = vmatpush1.msra.mxu0 0.0
    %1279 = vmatprep.subr.mxu0 0.0
    %1280 = vmatpush1.msra.mxu0 0.0
    %1281 = vmatprep.subr.mxu0 0.0
    %1282 = vmatpush1.msra.mxu0 0.0
    %1283 = vmatprep.subr.mxu0 0.0
    %1284 = vmatpush1.msra.mxu0 0.0
    %1285 = vmatprep.subr.mxu0 0.0
    %1286 = vmatpush1.msra.mxu0 0.0
    %1287 = vmatprep.subr.mxu0 0.0
    %1288 = vmatpush1.msra.mxu0 0.0
    %1289 = vmatprep.mubr.f32.mxu0 0.0
    %1290 = vmatmul.mubr.f32.gmra.mrb[0].mxu0 %v1223
    %v1291 = vpop.f32.mrb[0].mxu0
    %v1292 = vadd.f32 0.0, %v1291
    %v1293 = vpop.f32.mrb[0].mxu0
    %1294 = vdwg.mxu0
    %v1296 = vsel %vm468, %v1143, 0
    %1298 = vmatprep.subr.mxu0 0.0
    %1299 = vmatpush1.msra.mxu0 %v453
    %1300 = vmatprep.subr.mxu0 0.0
    %1301 = vmatpush1.msra.mxu0 0.0
    %1302 = vmatprep.subr.mxu0 0.0
    %1303 = vmatpush1.msra.mxu0 0.0
    %1304 = vmatprep.subr.mxu0 0.0
    %1305 = vmatpush1.msra.mxu0 0.0
    %1306 = vmatprep.subr.mxu0 0.0
    %1307 = vmatpush1.msra.mxu0 0.0
    %1308 = vmatprep.subr.mxu0 0.0
    %1309 = vmatpush1.msra.mxu0 0.0
    %1310 = vmatprep.subr.mxu0 0.0
    %1311 = vmatpush1.msra.mxu0 0.0
    %1312 = vmatprep.subr.mxu0 0.0
    %1313 = vmatpush1.msra.mxu0 0.0
    %1314 = vmatprep.subr.mxu0 0.0
    %1315 = vmatpush1.msra.mxu0 0.0
    %1316 = vmatprep.subr.mxu0 0.0
    %1317 = vmatpush1.msra.mxu0 0.0
    %1318 = vmatprep.subr.mxu0 0.0
    %1319 = vmatpush1.msra.mxu0 0.0
    %1320 = vmatprep.subr.mxu0 0.0
    %1321 = vmatpush1.msra.mxu0 0.0
    %1322 = vmatprep.subr.mxu0 0.0
    %1323 = vmatpush1.msra.mxu0 0.0
    %1324 = vmatprep.subr.mxu0 0.0
    %1325 = vmatpush1.msra.mxu0 0.0
    %1326 = vmatprep.subr.mxu0 0.0
    %1327 = vmatpush1.msra.mxu0 0.0
    %1328 = vmatprep.subr.mxu0 0.0
    %1329 = vmatpush1.msra.mxu0 0.0
    %1330 = vmatprep.subr.mxu0 0.0
    %1331 = vmatpush1.msra.mxu0 0.0
    %1332 = vmatprep.subr.mxu0 0.0
    %1333 = vmatpush1.msra.mxu0 0.0
    %1334 = vmatprep.subr.mxu0 0.0
    %1335 = vmatpush1.msra.mxu0 0.0
    %1336 = vmatprep.subr.mxu0 0.0
    %1337 = vmatpush1.msra.mxu0 0.0
    %1338 = vmatprep.subr.mxu0 0.0
    %1339 = vmatpush1.msra.mxu0 0.0
    %1340 = vmatprep.subr.mxu0 0.0
    %1341 = vmatpush1.msra.mxu0 0.0
    %1342 = vmatprep.subr.mxu0 0.0
    %1343 = vmatpush1.msra.mxu0 0.0
    %1344 = vmatprep.subr.mxu0 0.0
    %1345 = vmatpush1.msra.mxu0 0.0
    %1346 = vmatprep.subr.mxu0 0.0
    %1347 = vmatpush1.msra.mxu0 0.0
    %1348 = vmatprep.subr.mxu0 0.0
    %1349 = vmatpush1.msra.mxu0 0.0
    %1350 = vmatprep.subr.mxu0 0.0
    %1351 = vmatpush1.msra.mxu0 0.0
    %1352 = vmatprep.subr.mxu0 0.0
    %1353 = vmatpush1.msra.mxu0 0.0
    %1354 = vmatprep.subr.mxu0 0.0
    %1355 = vmatpush1.msra.mxu0 0.0
    %1356 = vmatprep.subr.mxu0 0.0
    %1357 = vmatpush1.msra.mxu0 0.0
    %1358 = vmatprep.subr.mxu0 0.0
    %1359 = vmatpush1.msra.mxu0 0.0
    %1360 = vmatprep.subr.mxu0 0.0
    %1361 = vmatpush1.msra.mxu0 0.0
    %1362 = vmatprep.mubr.f32.mxu0 0.0
    %1363 = vmatmul.mubr.f32.gmra.mrb[0].mxu0 %v1296
    %v1364 = vpop.f32.mrb[0].mxu0
    %v1365 = vadd.f32 0.0, %v1364
    %v1366 = vpop.f32.mrb[0].mxu0
    %1367 = vdwg.mxu0
    %v1369 = vsel %vm468, %v1144, 0
    %1371 = vmatprep.subr.mxu0 0.0
    %1372 = vmatpush1.msra.mxu0 %v456
    %1373 = vmatprep.subr.mxu0 0.0
    %1374 = vmatpush1.msra.mxu0 0.0
    %1375 = vmatprep.subr.mxu0 0.0
    %1376 = vmatpush1.msra.mxu0 0.0
    %1377 = vmatprep.subr.mxu0 0.0
    %1378 = vmatpush1.msra.mxu0 0.0
    %1379 = vmatprep.subr.mxu0 0.0
    %1380 = vmatpush1.msra.mxu0 0.0
    %1381 = vmatprep.subr.mxu0 0.0
    %1382 = vmatpush1.msra.mxu0 0.0
    %1383 = vmatprep.subr.mxu0 0.0
    %1384 = vmatpush1.msra.mxu0 0.0
    %1385 = vmatprep.subr.mxu0 0.0
    %1386 = vmatpush1.msra.mxu0 0.0
    %1387 = vmatprep.subr.mxu0 0.0
    %1388 = vmatpush1.msra.mxu0 0.0
    %1389 = vmatprep.subr.mxu0 0.0
    %1390 = vmatpush1.msra.mxu0 0.0
    %1391 = vmatprep.subr.mxu0 0.0
    %1392 = vmatpush1.msra.mxu0 0.0
    %1393 = vmatprep.subr.mxu0 0.0
    %1394 = vmatpush1.msra.mxu0 0.0
    %1395 = vmatprep.subr.mxu0 0.0
    %1396 = vmatpush1.msra.mxu0 0.0
    %1397 = vmatprep.subr.mxu0 0.0
    %1398 = vmatpush1.msra.mxu0 0.0
    %1399 = vmatprep.subr.mxu0 0.0
    %1400 = vmatpush1.msra.mxu0 0.0
    %1401 = vmatprep.subr.mxu0 0.0
    %1402 = vmatpush1.msra.mxu0 0.0
    %1403 = vmatprep.subr.mxu0 0.0
    %1404 = vmatpush1.msra.mxu0 0.0
    %1405 = vmatprep.subr.mxu0 0.0
    %1406 = vmatpush1.msra.mxu0 0.0
    %1407 = vmatprep.subr.mxu0 0.0
    %1408 = vmatpush1.msra.mxu0 0.0
    %1409 = vmatprep.subr.mxu0 0.0
    %1410 = vmatpush1.msra.mxu0 0.0
    %1411 = vmatprep.subr.mxu0 0.0
    %1412 = vmatpush1.msra.mxu0 0.0
    %1413 = vmatprep.subr.mxu0 0.0
    %1414 = vmatpush1.msra.mxu0 0.0
    %1415 = vmatprep.subr.mxu0 0.0
    %1416 = vmatpush1.msra.mxu0 0.0
    %1417 = vmatprep.subr.mxu0 0.0
    %1418 = vmatpush1.msra.mxu0 0.0
    %1419 = vmatprep.subr.mxu0 0.0
    %1420 = vmatpush1.msra.mxu0 0.0
    %1421 = vmatprep.subr.mxu0 0.0
    %1422 = vmatpush1.msra.mxu0 0.0
    %1423 = vmatprep.subr.mxu0 0.0
    %1424 = vmatpush1.msra.mxu0 0.0
    %1425 = vmatprep.subr.mxu0 0.0
    %1426 = vmatpush1.msra.mxu0 0.0
    %1427 = vmatprep.subr.mxu0 0.0
    %1428 = vmatpush1.msra.mxu0 0.0
    %1429 = vmatprep.subr.mxu0 0.0
    %1430 = vmatpush1.msra.mxu0 0.0
    %1431 = vmatprep.subr.mxu0 0.0
    %1432 = vmatpush1.msra.mxu0 0.0
    %1433 = vmatprep.subr.mxu0 0.0
    %1434 = vmatpush1.msra.mxu0 0.0
    %1435 = vmatprep.mubr.f32.mxu0 0.0
    %1436 = vmatmul.mubr.f32.gmra.mrb[0].mxu0 %v1369
    %v1437 = vpop.f32.mrb[0].mxu0
    %v1438 = vadd.f32 0.0, %v1437
    %v1439 = vpop.f32.mrb[0].mxu0
    %1440 = vdwg.mxu0
    %v1442 = vsel %vm468, %v1145, 0
    %1444 = vmatprep.subr.mxu0 0.0
    %1445 = vmatpush1.msra.mxu0 %v417
    %1446 = vmatprep.subr.mxu0 0.0
    %1447 = vmatpush1.msra.mxu0 0.0
    %1448 = vmatprep.subr.mxu0 0.0
    %1449 = vmatpush1.msra.mxu0 0.0
    %1450 = vmatprep.subr.mxu0 0.0
    %1451 = vmatpush1.msra.mxu0 0.0
    %1452 = vmatprep.subr.mxu0 0.0
    %1453 = vmatpush1.msra.mxu0 0.0
    %1454 = vmatprep.subr.mxu0 0.0
    %1455 = vmatpush1.msra.mxu0 0.0
    %1456 = vmatprep.subr.mxu0 0.0
    %1457 = vmatpush1.msra.mxu0 0.0
    %1458 = vmatprep.subr.mxu0 0.0
    %1459 = vmatpush1.msra.mxu0 0.0
    %1460 = vmatprep.subr.mxu0 0.0
    %1461 = vmatpush1.msra.mxu0 0.0
    %1462 = vmatprep.subr.mxu0 0.0
    %1463 = vmatpush1.msra.mxu0 0.0
    %1464 = vmatprep.subr.mxu0 0.0
    %1465 = vmatpush1.msra.mxu0 0.0
    %1466 = vmatprep.subr.mxu0 0.0
    %1467 = vmatpush1.msra.mxu0 0.0
    %1468 = vmatprep.subr.mxu0 0.0
    %1469 = vmatpush1.msra.mxu0 0.0
    %1470 = vmatprep.subr.mxu0 0.0
    %1471 = vmatpush1.msra.mxu0 0.0
    %1472 = vmatprep.subr.mxu0 0.0
    %1473 = vmatpush1.msra.mxu0 0.0
    %1474 = vmatprep.subr.mxu0 0.0
    %1475 = vmatpush1.msra.mxu0 0.0
    %1476 = vmatprep.subr.mxu0 0.0
    %1477 = vmatpush1.msra.mxu0 0.0
    %1478 = vmatprep.subr.mxu0 0.0
    %1479 = vmatpush1.msra.mxu0 0.0
    %1480 = vmatprep.subr.mxu0 0.0
    %1481 = vmatpush1.msra.mxu0 0.0
    %1482 = vmatprep.subr.mxu0 0.0
    %1483 = vmatpush1.msra.mxu0 0.0
    %1484 = vmatprep.subr.mxu0 0.0
    %1485 = vmatpush1.msra.mxu0 0.0
    %1486 = vmatprep.subr.mxu0 0.0
    %1487 = vmatpush1.msra.mxu0 0.0
    %1488 = vmatprep.subr.mxu0 0.0
    %1489 = vmatpush1.msra.mxu0 0.0
    %1490 = vmatprep.subr.mxu0 0.0
    %1491 = vmatpush1.msra.mxu0 0.0
    %1492 = vmatprep.subr.mxu0 0.0
    %1493 = vmatpush1.msra.mxu0 0.0
    %1494 = vmatprep.subr.mxu0 0.0
    %1495 = vmatpush1.msra.mxu0 0.0
    %1496 = vmatprep.subr.mxu0 0.0
    %1497 = vmatpush1.msra.mxu0 0.0
    %1498 = vmatprep.subr.mxu0 0.0
    %1499 = vmatpush1.msra.mxu0 0.0
    %1500 = vmatprep.subr.mxu0 0.0
    %1501 = vmatpush1.msra.mxu0 0.0
    %1502 = vmatprep.subr.mxu0 0.0
    %1503 = vmatpush1.msra.mxu0 0.0
    %1504 = vmatprep.subr.mxu0 0.0
    %1505 = vmatpush1.msra.mxu0 0.0
    %1506 = vmatprep.subr.mxu0 0.0
    %1507 = vmatpush1.msra.mxu0 0.0
    %1508 = vmatprep.mubr.f32.mxu0 0.0
    %1509 = vmatmul.mubr.f32.gmra.mrb[0].mxu0 %v1442
    %v1510 = vpop.f32.mrb[0].mxu0
    %v1511 = vadd.f32 0.0, %v1510
    %v1512 = vpop.f32.mrb[0].mxu0
    %1513 = vdwg.mxu0
    %v1515 = vsel %vm468, %v1146, 0
    %1517 = vmatprep.subr.mxu0 0.0
    %1518 = vmatpush1.msra.mxu0 %v460
    %1519 = vmatprep.subr.mxu0 0.0
    %1520 = vmatpush1.msra.mxu0 0.0
    %1521 = vmatprep.subr.mxu0 0.0
    %1522 = vmatpush1.msra.mxu0 0.0
    %1523 = vmatprep.subr.mxu0 0.0
    %1524 = vmatpush1.msra.mxu0 0.0
    %1525 = vmatprep.subr.mxu0 0.0
    %1526 = vmatpush1.msra.mxu0 0.0
    %1527 = vmatprep.subr.mxu0 0.0
    %1528 = vmatpush1.msra.mxu0 0.0
    %1529 = vmatprep.subr.mxu0 0.0
    %1530 = vmatpush1.msra.mxu0 0.0
    %1531 = vmatprep.subr.mxu0 0.0
    %1532 = vmatpush1.msra.mxu0 0.0
    %1533 = vmatprep.subr.mxu0 0.0
    %1534 = vmatpush1.msra.mxu0 0.0
    %1535 = vmatprep.subr.mxu0 0.0
    %1536 = vmatpush1.msra.mxu0 0.0
    %1537 = vmatprep.subr.mxu0 0.0
    %1538 = vmatpush1.msra.mxu0 0.0
    %1539 = vmatprep.subr.mxu0 0.0
    %1540 = vmatpush1.msra.mxu0 0.0
    %1541 = vmatprep.subr.mxu0 0.0
    %1542 = vmatpush1.msra.mxu0 0.0
    %1543 = vmatprep.subr.mxu0 0.0
    %1544 = vmatpush1.msra.mxu0 0.0
    %1545 = vmatprep.subr.mxu0 0.0
    %1546 = vmatpush1.msra.mxu0 0.0
    %1547 = vmatprep.subr.mxu0 0.0
    %1548 = vmatpush1.msra.mxu0 0.0
    %1549 = vmatprep.subr.mxu0 0.0
    %1550 = vmatpush1.msra.mxu0 0.0
    %1551 = vmatprep.subr.mxu0 0.0
    %1552 = vmatpush1.msra.mxu0 0.0
    %1553 = vmatprep.subr.mxu0 0.0
    %1554 = vmatpush1.msra.mxu0 0.0
    %1555 = vmatprep.subr.mxu0 0.0
    %1556 = vmatpush1.msra.mxu0 0.0
    %1557 = vmatprep.subr.mxu0 0.0
    %1558 = vmatpush1.msra.mxu0 0.0
    %1559 = vmatprep.subr.mxu0 0.0
    %1560 = vmatpush1.msra.mxu0 0.0
    %1561 = vmatprep.subr.mxu0 0.0
    %1562 = vmatpush1.msra.mxu0 0.0
    %1563 = vmatprep.subr.mxu0 0.0
    %1564 = vmatpush1.msra.mxu0 0.0
    %1565 = vmatprep.subr.mxu0 0.0
    %1566 = vmatpush1.msra.mxu0 0.0
    %1567 = vmatprep.subr.mxu0 0.0
    %1568 = vmatpush1.msra.mxu0 0.0
    %1569 = vmatprep.subr.mxu0 0.0
    %1570 = vmatpush1.msra.mxu0 0.0
    %1571 = vmatprep.subr.mxu0 0.0
    %1572 = vmatpush1.msra.mxu0 0.0
    %1573 = vmatprep.subr.mxu0 0.0
    %1574 = vmatpush1.msra.mxu0 0.0
    %1575 = vmatprep.subr.mxu0 0.0
    %1576 = vmatpush1.msra.mxu0 0.0
    %1577 = vmatprep.subr.mxu0 0.0
    %1578 = vmatpush1.msra.mxu0 0.0
    %1579 = vmatprep.subr.mxu0 0.0
    %1580 = vmatpush1.msra.mxu0 0.0
    %1581 = vmatprep.mubr.f32.mxu0 0.0
    %1582 = vmatmul.mubr.f32.gmra.mrb[0].mxu0 %v1515
    %v1583 = vpop.f32.mrb[0].mxu0
    %v1584 = vadd.f32 0.0, %v1583
    %v1585 = vpop.f32.mrb[0].mxu0
    %1586 = vdwg.mxu0
    %v1588 = vsel %vm468, %v1147, 0
    %1590 = vmatprep.subr.mxu0 0.0
    %1591 = vmatpush1.msra.mxu0 %v463
    %1592 = vmatprep.subr.mxu0 0.0
    %1593 = vmatpush1.msra.mxu0 0.0
    %1594 = vmatprep.subr.mxu0 0.0
    %1595 = vmatpush1.msra.mxu0 0.0
    %1596 = vmatprep.subr.mxu0 0.0
    %1597 = vmatpush1.msra.mxu0 0.0
    %1598 = vmatprep.subr.mxu0 0.0
    %1599 = vmatpush1.msra.mxu0 0.0
    %1600 = vmatprep.subr.mxu0 0.0
    %1601 = vmatpush1.msra.mxu0 0.0
    %1602 = vmatprep.subr.mxu0 0.0
    %1603 = vmatpush1.msra.mxu0 0.0
    %1604 = vmatprep.subr.mxu0 0.0
    %1605 = vmatpush1.msra.mxu0 0.0
    %1606 = vmatprep.subr.mxu0 0.0
    %1607 = vmatpush1.msra.mxu0 0.0
    %1608 = vmatprep.subr.mxu0 0.0
    %1609 = vmatpush1.msra.mxu0 0.0
    %1610 = vmatprep.subr.mxu0 0.0
    %1611 = vmatpush1.msra.mxu0 0.0
    %1612 = vmatprep.subr.mxu0 0.0
    %1613 = vmatpush1.msra.mxu0 0.0
    %1614 = vmatprep.subr.mxu0 0.0
    %1615 = vmatpush1.msra.mxu0 0.0
    %1616 = vmatprep.subr.mxu0 0.0
    %1617 = vmatpush1.msra.mxu0 0.0
    %1618 = vmatprep.subr.mxu0 0.0
    %1619 = vmatpush1.msra.mxu0 0.0
    %1620 = vmatprep.subr.mxu0 0.0
    %1621 = vmatpush1.msra.mxu0 0.0
    %1622 = vmatprep.subr.mxu0 0.0
    %1623 = vmatpush1.msra.mxu0 0.0
    %1624 = vmatprep.subr.mxu0 0.0
    %1625 = vmatpush1.msra.mxu0 0.0
    %1626 = vmatprep.subr.mxu0 0.0
    %1627 = vmatpush1.msra.mxu0 0.0
    %1628 = vmatprep.subr.mxu0 0.0
    %1629 = vmatpush1.msra.mxu0 0.0
    %1630 = vmatprep.subr.mxu0 0.0
    %1631 = vmatpush1.msra.mxu0 0.0
    %1632 = vmatprep.subr.mxu0 0.0
    %1633 = vmatpush1.msra.mxu0 0.0
    %1634 = vmatprep.subr.mxu0 0.0
    %1635 = vmatpush1.msra.mxu0 0.0
    %1636 = vmatprep.subr.mxu0 0.0
    %1637 = vmatpush1.msra.mxu0 0.0
    %1638 = vmatprep.subr.mxu0 0.0
    %1639 = vmatpush1.msra.mxu0 0.0
    %1640 = vmatprep.subr.mxu0 0.0
    %1641 = vmatpush1.msra.mxu0 0.0
    %1642 = vmatprep.subr.mxu0 0.0
    %1643 = vmatpush1.msra.mxu0 0.0
    %1644 = vmatprep.subr.mxu0 0.0
    %1645 = vmatpush1.msra.mxu0 0.0
    %1646 = vmatprep.subr.mxu0 0.0
    %1647 = vmatpush1.msra.mxu0 0.0
    %1648 = vmatprep.subr.mxu0 0.0
    %1649 = vmatpush1.msra.mxu0 0.0
    %1650 = vmatprep.subr.mxu0 0.0
    %1651 = vmatpush1.msra.mxu0 0.0
    %1652 = vmatprep.subr.mxu0 0.0
    %1653 = vmatpush1.msra.mxu0 0.0
    %1654 = vmatprep.mubr.f32.mxu0 0.0
    %1655 = vmatmul.mubr.f32.gmra.mrb[0].mxu0 %v1588
    %v1656 = vpop.f32.mrb[0].mxu0
    %v1657 = vadd.f32 0.0, %v1656
    %v1658 = vpop.f32.mrb[0].mxu0
    %1659 = vdwg.mxu0
    %v1661 = vsel %vm468, %v1148, 0
    %1663 = vmatprep.subr.mxu0 0.0
    %1664 = vmatpush1.msra.mxu0 %v466
    %1665 = vmatprep.subr.mxu0 0.0
    %1666 = vmatpush1.msra.mxu0 0.0
    %1667 = vmatprep.subr.mxu0 0.0
    %1668 = vmatpush1.msra.mxu0 0.0
    %1669 = vmatprep.subr.mxu0 0.0
    %1670 = vmatpush1.msra.mxu0 0.0
    %1671 = vmatprep.subr.mxu0 0.0
    %1672 = vmatpush1.msra.mxu0 0.0
    %1673 = vmatprep.subr.mxu0 0.0
    %1674 = vmatpush1.msra.mxu0 0.0
    %1675 = vmatprep.subr.mxu0 0.0
    %1676 = vmatpush1.msra.mxu0 0.0
    %1677 = vmatprep.subr.mxu0 0.0
    %1678 = vmatpush1.msra.mxu0 0.0
    %1679 = vmatprep.subr.mxu0 0.0
    %1680 = vmatpush1.msra.mxu0 0.0
    %1681 = vmatprep.subr.mxu0 0.0
    %1682 = vmatpush1.msra.mxu0 0.0
    %1683 = vmatprep.subr.mxu0 0.0
    %1684 = vmatpush1.msra.mxu0 0.0
    %1685 = vmatprep.subr.mxu0 0.0
    %1686 = vmatpush1.msra.mxu0 0.0
    %1687 = vmatprep.subr.mxu0 0.0
    %1688 = vmatpush1.msra.mxu0 0.0
    %1689 = vmatprep.subr.mxu0 0.0
    %1690 = vmatpush1.msra.mxu0 0.0
    %1691 = vmatprep.subr.mxu0 0.0
    %1692 = vmatpush1.msra.mxu0 0.0
    %1693 = vmatprep.subr.mxu0 0.0
    %1694 = vmatpush1.msra.mxu0 0.0
    %1695 = vmatprep.subr.mxu0 0.0
    %1696 = vmatpush1.msra.mxu0 0.0
    %1697 = vmatprep.subr.mxu0 0.0
    %1698 = vmatpush1.msra.mxu0 0.0
    %1699 = vmatprep.subr.mxu0 0.0
    %1700 = vmatpush1.msra.mxu0 0.0
    %1701 = vmatprep.subr.mxu0 0.0
    %1702 = vmatpush1.msra.mxu0 0.0
    %1703 = vmatprep.subr.mxu0 0.0
    %1704 = vmatpush1.msra.mxu0 0.0
    %1705 = vmatprep.subr.mxu0 0.0
    %1706 = vmatpush1.msra.mxu0 0.0
    %1707 = vmatprep.subr.mxu0 0.0
    %1708 = vmatpush1.msra.mxu0 0.0
    %1709 = vmatprep.subr.mxu0 0.0
    %1710 = vmatpush1.msra.mxu0 0.0
    %1711 = vmatprep.subr.mxu0 0.0
    %1712 = vmatpush1.msra.mxu0 0.0
    %1713 = vmatprep.subr.mxu0 0.0
    %1714 = vmatpush1.msra.mxu0 0.0
    %1715 = vmatprep.subr.mxu0 0.0
    %1716 = vmatpush1.msra.mxu0 0.0
    %1717 = vmatprep.subr.mxu0 0.0
    %1718 = vmatpush1.msra.mxu0 0.0
    %1719 = vmatprep.subr.mxu0 0.0
    %1720 = vmatpush1.msra.mxu0 0.0
    %1721 = vmatprep.subr.mxu0 0.0
    %1722 = vmatpush1.msra.mxu0 0.0
    %1723 = vmatprep.subr.mxu0 0.0
    %1724 = vmatpush1.msra.mxu0 0.0
    %1725 = vmatprep.subr.mxu0 0.0
    %1726 = vmatpush1.msra.mxu0 0.0
    %1727 = vmatprep.mubr.f32.mxu0 0.0
    %1728 = vmatmul.mubr.f32.gmra.mrb[0].mxu0 %v1661
    %v1729 = vpop.f32.mrb[0].mxu0
    %v1730 = vadd.f32 0.0, %v1729
    %v1731 = vpop.f32.mrb[0].mxu0
    %1732 = vdwg.mxu0
    %1734 = vrot.lane.b32.xlu0 %v1292, 8
    %v1735 = vpop.permute.xlu0 %1734
    %1738 = vrot.lane.b32.xlu0 %v1365, 16
    %v1739 = vpop.permute.xlu0 %1738
    %1742 = vrot.lane.b32.xlu0 %v1438, 24
    %v1743 = vpop.permute.xlu0 %1742
    %v1745 = vsel %vm468, %v1219, %v1735
    %vm1746 = vcmask 130048
    %v1747 = vsel %vm1746, %v1745, %v1739
    %vm1748 = vcmask 195584
    %v1749 = vsel %vm1748, %v1747, %v1743
    %1751 = vrot.lane.b32.xlu0 %v1584, 8
    %v1752 = vpop.permute.xlu0 %1751
    %1755 = vrot.lane.b32.xlu0 %v1657, 16
    %v1756 = vpop.permute.xlu0 %1755
    %1759 = vrot.lane.b32.xlu0 %v1730, 24
    %v1760 = vpop.permute.xlu0 %1759
    %v1762 = vsel %vm468, %v1511, %v1752
    %v1763 = vsel %vm1746, %v1762, %v1756
    %v1764 = vsel %vm1748, %v1763, %v1760
    %v1765 = vld [vmem:[%s9] sm:$0xff]
    %v1766 = vld [vmem:[%s9 + $0x8] sm:$0xff]
    %v1767 = vld [vmem:[%s9 + $0x10] sm:$0xff]
    %v1768 = vld [vmem:[%s9 + $0x18] sm:$0xff]
    %v1769 = vld [vmem:[%s10] sm:$0x1]
    %v1771 = vlaneseq
    %v1772 = vshrl.u32 %v1771, 7
    %v1773 = vsub.s32 0, %v1772
    %v1774 = vrot.slane %v1769, %v1773
    %v1777 = vsel %vm152, %v1749, 0
    %v1780 = vsel %vm152, %v1764, 0
    %1782 = vmatprep.subr.mxu0 0.0
    %1783 = vmatpush1.msra.mxu0 %v1765
    %1784 = vmatprep.subr.mxu0 0.0
    %1785 = vmatpush1.msra.mxu0 %v1766
    %1786 = vmatprep.subr.mxu0 0.0
    %1787 = vmatpush1.msra.mxu0 %v1767
    %1788 = vmatprep.subr.mxu0 0.0
    %1789 = vmatpush1.msra.mxu0 %v1768
    %1790 = vmatprep.subr.mxu0 0.0
    %1791 = vmatpush1.msra.mxu0 0.0
    %1792 = vmatprep.subr.mxu0 0.0
    %1793 = vmatpush1.msra.mxu0 0.0
    %1794 = vmatprep.subr.mxu0 0.0
    %1795 = vmatpush1.msra.mxu0 0.0
    %1796 = vmatprep.subr.mxu0 0.0
    %1797 = vmatpush1.msra.mxu0 0.0
    %1798 = vmatprep.subr.mxu0 0.0
    %1799 = vmatpush1.msra.mxu0 0.0
    %1800 = vmatprep.subr.mxu0 0.0
    %1801 = vmatpush1.msra.mxu0 0.0
    %1802 = vmatprep.subr.mxu0 0.0
    %1803 = vmatpush1.msra.mxu0 0.0
    %1804 = vmatprep.subr.mxu0 0.0
    %1805 = vmatpush1.msra.mxu0 0.0
    %1806 = vmatprep.subr.mxu0 0.0
    %1807 = vmatpush1.msra.mxu0 0.0
    %1808 = vmatprep.subr.mxu0 0.0
    %1809 = vmatpush1.msra.mxu0 0.0
    %1810 = vmatprep.subr.mxu0 0.0
    %1811 = vmatpush1.msra.mxu0 0.0
    %1812 = vmatprep.subr.mxu0 0.0
    %1813 = vmatpush1.msra.mxu0 0.0
    %1814 = vmatprep.subr.mxu0 0.0
    %1815 = vmatpush1.msra.mxu0 0.0
    %1816 = vmatprep.subr.mxu0 0.0
    %1817 = vmatpush1.msra.mxu0 0.0
    %1818 = vmatprep.subr.mxu0 0.0
    %1819 = vmatpush1.msra.mxu0 0.0
    %1820 = vmatprep.subr.mxu0 0.0
    %1821 = vmatpush1.msra.mxu0 0.0
    %1822 = vmatprep.subr.mxu0 0.0
    %1823 = vmatpush1.msra.mxu0 0.0
    %1824 = vmatprep.subr.mxu0 0.0
    %1825 = vmatpush1.msra.mxu0 0.0
    %1826 = vmatprep.subr.mxu0 0.0
    %1827 = vmatpush1.msra.mxu0 0.0
    %1828 = vmatprep.subr.mxu0 0.0
    %1829 = vmatpush1.msra.mxu0 0.0
    %1830 = vmatprep.subr.mxu0 0.0
    %1831 = vmatpush1.msra.mxu0 0.0
    %1832 = vmatprep.subr.mxu0 0.0
    %1833 = vmatpush1.msra.mxu0 0.0
    %1834 = vmatprep.subr.mxu0 0.0
    %1835 = vmatpush1.msra.mxu0 0.0
    %1836 = vmatprep.subr.mxu0 0.0
    %1837 = vmatpush1.msra.mxu0 0.0
    %1838 = vmatprep.subr.mxu0 0.0
    %1839 = vmatpush1.msra.mxu0 0.0
    %1840 = vmatprep.subr.mxu0 0.0
    %1841 = vmatpush1.msra.mxu0 0.0
    %1842 = vmatprep.subr.mxu0 0.0
    %1843 = vmatpush1.msra.mxu0 0.0
    %1844 = vmatprep.subr.mxu0 0.0
    %1845 = vmatpush1.msra.mxu0 0.0
    %1846 = vmatprep.mubr.f32.mxu0 0.0
    %1847 = vmatmul.mubr.f32.gmra.mrb[0].mxu0 %v1777
    %v1848 = vpop.f32.mrb[0].mxu0
    %v1849 = vadd.f32 %v1774, %v1848
    %v1850 = vpop.f32.mrb[0].mxu0
    %1851 = vmatprep.mubr.f32.mxu0 0.0
    %1852 = vmatmul.mubr.f32.gmra.mrb[0].mxu0 %v1780
    %v1853 = vpop.f32.mrb[0].mxu0
    %v1854 = vadd.f32 %v1774, %v1853
    %v1855 = vpop.f32.mrb[0].mxu0
    %1856 = vdwg.mxu0
    %1857 = vst.msk [vmem:[#allocation14] sm:$0xff] %vm152, %v1849
    %1858 = vst.msk [vmem:[#allocation14 + $0x8] sm:$0xff] %vm152, %v1854
    %1859 = vst.msk [vmem:[#allocation15] sm:$0xff] %vm468, %v1141
    %1860 = vst.msk [vmem:[#allocation15 + $0x8] sm:$0xff] %vm468, %v1142
    %1861 = vst.msk [vmem:[#allocation15 + $0x10] sm:$0xff] %vm468, %v1143
    %1862 = vst.msk [vmem:[#allocation15 + $0x18] sm:$0xff] %vm468, %v1144
    %1863 = vst.msk [vmem:[#allocation15 + $0x20] sm:$0xff] %vm468, %v1145
    %1864 = vst.msk [vmem:[#allocation15 + $0x28] sm:$0xff] %vm468, %v1146
    %1865 = vst.msk [vmem:[#allocation15 + $0x30] sm:$0xff] %vm468, %v1147
    %1866 = vst.msk [vmem:[#allocation15 + $0x38] sm:$0xff] %vm468, %v1148
    // Predicated region
    $region74: #{tpu_custom_call.1} parent=1 // pred_check
      _
    $region75: #{tpu_custom_call.1} parent=1 // pred_check_branch
      %1868 = sbr.rel (0) target = $region77
    $region76: #{tpu_custom_call.1} parent=1 // pred_region
      %s1870 = ssub.s32 256, 256
      %1871 = vsyncadd [#allocation4], %s1870
      %s1872 = sshll.u32 [#allocation14], 4
      %s1873 = int_to_ptr.vmem [resolvable:$true] %s1872
      %1878 = dma.vmem_to_hbm [thread:$0]  %s1873, 256, %s11, [#allocation4], 128, 128, 8
    $region77: #{tpu_custom_call.1} parent=1 // pred_fallthru
      _
    // Predicated region
    $region78: #{tpu_custom_call.1} parent=1 // pred_check
      _
    $region79: #{tpu_custom_call.1} parent=1 // pred_check_branch
      %1880 = sbr.rel (0) target = $region81
    $region80: #{tpu_custom_call.1} parent=1 // pred_region
      %s1882 = ssub.s32 1024, 1024
      %1883 = vsyncadd [#allocation16], %s1882
      %s1884 = sshll.u32 [#allocation15], 4
      %s1885 = int_to_ptr.vmem [resolvable:$true] %s1884
      %1890 = dma.vmem_to_hbm [thread:$0]  %s1885, 1024, %s12, [#allocation16], 128, 128, 8
    $region81: #{tpu_custom_call.1} parent=1 // pred_fallthru
      _
    // Predicated region
    $region82: #{tpu_custom_call.1} parent=1 // pred_check
      _
    $region83: #{tpu_custom_call.1} parent=1 // pred_check_branch
      %1892 = sbr.rel (0) target = $region85
    $region84: #{tpu_custom_call.1} parent=1 // pred_region
      %1893 = dma.done [#allocation4], 256
    $region85: #{tpu_custom_call.1} parent=1 // pred_fallthru
      _
    // Predicated region
    $region86: #{tpu_custom_call.1} parent=1 // pred_check
      _
    $region87: #{tpu_custom_call.1} parent=1 // pred_check_branch
      %1895 = sbr.rel (0) target = $region89
    $region88: #{tpu_custom_call.1} parent=1 // pred_region
      %1896 = dma.done [#allocation16], 1024
    $region89: #{tpu_custom_call.1} parent=1 // pred_fallthru
      _
    %1897 = vsyncpa [#allocation3], 1
    %1898 = vsyncpa [#allocation6], 1
    %1899 = vsyncpa [#allocation9], 1
    %1900 = vsyncpa [#allocation12], 1
    %1901 = vsyncpa [#allocation4], 1
    %1902 = vsyncpa [#allocation16], 1

</llo_original>
